<compile_context>
chip_gen: v5e
topology: v5e:2x2
jax: 0.10.0
libtpu: 0.0.40
codegen_flags: <defaults>
</compile_context>

<pallas_src>
import math
from functools import partial

import jax
import jax.numpy as jnp
from jax.experimental import pallas as pl
from jax.experimental.pallas import tpu as pltpu


# ----------------------------------------------------------------------------
# In-kernel helpers
# ----------------------------------------------------------------------------
def _layernorm(x, g, b, eps=1e-5):
    # PyTorch nn.LayerNorm semantics: biased variance, eps inside the sqrt.
    mu = jnp.mean(x, axis=-1, keepdims=True)
    var = jnp.mean((x - mu) ** 2, axis=-1, keepdims=True)
    return (x - mu) * jax.lax.rsqrt(var + eps) * g + b


# ----------------------------------------------------------------------------
# Fused kernel: all transformer layers + final LayerNorm, grid = (batch, layer)
# ----------------------------------------------------------------------------
def clip_stack_kernel(x_ref,
                      ln1_g_ref, ln1_b_ref,
                      w_qkv_ref, b_qkv_ref,
                      w_out_ref, b_out_ref,
                      ln2_g_ref, ln2_b_ref,
                      w1_ref, b1_ref,
                      w2_ref, b2_ref,
                      lnf_g_ref, lnf_b_ref,
                      o_ref, *, n_head):
    layer = pl.program_id(1)
    n_layers = pl.num_programs(1)

    # Layer 0: seed the VMEM-resident residual stream from the embedding.
    @pl.when(layer == 0)
    def _():
        o_ref[...] = x_ref[...]

    x = o_ref[0]                               # (S, D) f32 residual stream
    S, D = x.shape
    d_head = D // n_head
    scale = 1.0 / math.sqrt(d_head)

    # ---- causal multi-head self-attention -----------------------------------
    h = _layernorm(x, ln1_g_ref[0], ln1_b_ref[0])
    qkv = jnp.dot(h.astype(jnp.bfloat16), w_qkv_ref[0],
                  preferred_element_type=jnp.float32) + b_qkv_ref[0]
    q = qkv[:, 0 * D:1 * D] * scale
    k = qkv[:, 1 * D:2 * D]
    v = qkv[:, 2 * D:3 * D]

    row = jax.lax.broadcasted_iota(jnp.int32, (S, S), 0)
    col = jax.lax.broadcasted_iota(jnp.int32, (S, S), 1)
    masked = col > row                         # strictly-upper triangle

    # Per-head accumulation straight into the output projection (no concat).
    attn = jnp.zeros((S, D), jnp.float32)
    for hh in range(n_head):                   # static head count, unrolled
        lo, hi = hh * d_head, (hh + 1) * d_head
        qs, ks, vs = q[:, lo:hi], k[:, lo:hi], v[:, lo:hi]
        s = jnp.dot(qs, ks.T, preferred_element_type=jnp.float32)
        s = jnp.where(masked, -1e30, s)
        s = s - jnp.max(s, axis=-1, keepdims=True)
        p = jnp.exp(s)
        p = p * pl.reciprocal(jnp.sum(p, axis=-1, keepdims=True), approx=True)
        head = jnp.dot(p, vs, preferred_element_type=jnp.float32)
        attn = attn + jnp.dot(head.astype(jnp.bfloat16),
                              w_out_ref[0, lo:hi, :],
                              preferred_element_type=jnp.float32)
    x = x + attn + b_out_ref[0]                # residual 1 (+ out-proj bias)

    # ---- quick-GELU MLP: y = x * sigmoid(1.702 x) ----------------------------
    h = _layernorm(x, ln2_g_ref[0], ln2_b_ref[0])
    h = jnp.dot(h.astype(jnp.bfloat16), w1_ref[0],
                preferred_element_type=jnp.float32) + b1_ref[0]
    h = h * jax.nn.sigmoid(1.702 * h)
    h = jnp.dot(h.astype(jnp.bfloat16), w2_ref[0],
                preferred_element_type=jnp.float32) + b2_ref[0]
    x = x + h                                  # residual 2

    @pl.when(layer != n_layers - 1)
    def _():
        o_ref[0] = x

    # Last layer: fuse the final LayerNorm before the single HBM writeback.
    @pl.when(layer == n_layers - 1)
    def _():
        o_ref[0] = _layernorm(x, lnf_g_ref[...], lnf_b_ref[...])


_STACKED_ORDER = ("ln1_g", "ln1_b", "w_qkv", "b_qkv", "w_out", "b_out",
                  "ln2_g", "ln2_b", "w1", "b1", "w2", "b2")


def clip_transformer(x, params, n_head):
    """All transformer layers + final LayerNorm in one fused pallas_call."""
    B, S, D = x.shape
    stacked = params["stacked"]
    n_layers = stacked["w_qkv"].shape[0]
    weights = [stacked[name] for name in _STACKED_ORDER]

    # Activation block: constant across the layer axis -> loaded once per batch.
    in_specs = [pl.BlockSpec((1, S, D), lambda b, l: (b, 0, 0))]
    # Per-layer stacked params: block index follows the layer grid axis so the
    # next layer's weights are prefetched (double-buffered) under compute.
    for w in weights:
        in_specs.append(pl.BlockSpec((1,) + w.shape[1:], lambda b, l: (l, 0, 0)))
    # Final LayerNorm params: constant full blocks.
    in_specs.append(pl.BlockSpec(params["lnf_g"].shape, lambda b, l: (0, 0)))
    in_specs.append(pl.BlockSpec(params["lnf_b"].shape, lambda b, l: (0, 0)))

    return pl.pallas_call(
        partial(clip_stack_kernel, n_head=n_head),
        out_shape=jax.ShapeDtypeStruct((B, S, D), jnp.float32),
        grid_spec=pltpu.PrefetchScalarGridSpec(
            num_scalar_prefetch=0,
            grid=(B, n_layers),
            in_specs=in_specs,
            out_specs=pl.BlockSpec((1, S, D), lambda b, l: (b, 0, 0)),
        ),
        compiler_params=pltpu.CompilerParams(
            dimension_semantics=("parallel", "arbitrary"),
            vmem_limit_bytes=64 * 1024 * 1024,
        ),
    )(x, *weights, params["lnf_g"], params["lnf_b"])


# ----------------------------------------------------------------------------
# Parameter construction (deterministic, in-script). Linear weights are stored
# transposed as (in, out) so kernels compute y = x @ W + b (== torch x @ W.T + b),
# stacked over layers, matmul weights in bfloat16.
# ----------------------------------------------------------------------------
def init_clip_params(key, n_vocab, n_embd, n_token, n_layers):
    D = n_embd
    L = n_layers
    k_tok, k_pos, k_qkv, k_out, k_w1, k_w2 = jax.random.split(key, 6)
    wdt = jnp.bfloat16
    return {
        "tok_emb": 0.02 * jax.random.normal(k_tok, (n_vocab, D), jnp.float32),
        "pos_emb": 0.02 * jax.random.normal(k_pos, (n_token, D), jnp.float32),
        "lnf_g": jnp.ones((1, D), jnp.float32),
        "lnf_b": jnp.zeros((1, D), jnp.float32),
        "stacked": {
            "ln1_g": jnp.ones((L, 1, D), jnp.float32),
            "ln1_b": jnp.zeros((L, 1, D), jnp.float32),
            "w_qkv": (0.02 * jax.random.normal(k_qkv, (L, D, 3 * D), jnp.float32)).astype(wdt),
            "b_qkv": jnp.zeros((L, 1, 3 * D), jnp.float32),
            "w_out": (0.02 * jax.random.normal(k_out, (L, D, D), jnp.float32)).astype(wdt),
            "b_out": jnp.zeros((L, 1, D), jnp.float32),
            "ln2_g": jnp.ones((L, 1, D), jnp.float32),
            "ln2_b": jnp.zeros((L, 1, D), jnp.float32),
            "w1": (0.02 * jax.random.normal(k_w1, (L, D, 4 * D), jnp.float32)).astype(wdt),
            "b1": jnp.zeros((L, 1, 4 * D), jnp.float32),
            "w2": (0.02 * jax.random.normal(k_w2, (L, 4 * D, D), jnp.float32)).astype(wdt),
            "b2": jnp.zeros((L, 1, D), jnp.float32),
        },
    }


# ----------------------------------------------------------------------------
# Full CLIP forward
# ----------------------------------------------------------------------------
def clip_forward(tokens, params, n_head):
    # TODO(synk): nn.Embedding token gather is a data-dependent row lookup;
    # it stays as jnp.take in plain JAX glue.  Everything downstream (all
    # transformer layers + final LayerNorm) runs inside one Pallas kernel.
    x = jnp.take(params["tok_emb"], tokens, axis=0) + params["pos_emb"][None, :, :]
    B, S, D = x.shape
    s_pad = ((S + 7) // 8) * 8          # pad seq to sublane multiple (77 -> 80)
    if s_pad != S:
        x = jnp.pad(x, ((0, 0), (0, s_pad - S), (0, 0)))
    out = clip_transformer(x, params, n_head)
    return out[:, :S, :]


# ----------------------------------------------------------------------------
if __name__ == "__main__":
    # Small config consistent with the module structure
    # (full CLIP: n_vocab=49408, n_embd=768, n_token=77, n_head=12, 12 layers).
    n_vocab, n_embd, n_token, n_head, n_layers = 1000, 128, 12, 4, 3
    batch = 2

    key = jax.random.PRNGKey(0)
    pkey, tkey = jax.random.split(key)
    params = init_clip_params(pkey, n_vocab, n_embd, n_token, n_layers)
    tokens = jax.random.randint(tkey, (batch, n_token), 0, n_vocab, dtype=jnp.int32)

    fwd = jax.jit(partial(clip_forward, n_head=n_head))
    out = jax.block_until_ready(fwd(tokens, params))

    assert out.shape == (batch, n_token, n_embd), out.shape
    assert out.dtype == jnp.float32
    assert bool(jnp.all(jnp.isfinite(out)))
    print("KERNEL_OK")
</pallas_src>

<mosaic_0001>
module attributes {stable_mosaic.version = 11 : i64} {
  func.func @clip_stack_kernel(%arg0: i32, %arg1: i32, %arg2: memref<1x16x128xf32, #tpu.memory_space<vmem>>, %arg3: memref<1x1x128xf32, #tpu.memory_space<vmem>>, %arg4: memref<1x1x128xf32, #tpu.memory_space<vmem>>, %arg5: memref<1x128x384xbf16, #tpu.memory_space<vmem>>, %arg6: memref<1x1x384xf32, #tpu.memory_space<vmem>>, %arg7: memref<1x128x128xbf16, #tpu.memory_space<vmem>>, %arg8: memref<1x1x128xf32, #tpu.memory_space<vmem>>, %arg9: memref<1x1x128xf32, #tpu.memory_space<vmem>>, %arg10: memref<1x1x128xf32, #tpu.memory_space<vmem>>, %arg11: memref<1x128x512xbf16, #tpu.memory_space<vmem>>, %arg12: memref<1x1x512xf32, #tpu.memory_space<vmem>>, %arg13: memref<1x512x128xbf16, #tpu.memory_space<vmem>>, %arg14: memref<1x1x128xf32, #tpu.memory_space<vmem>>, %arg15: memref<1x128xf32, #tpu.memory_space<vmem>>, %arg16: memref<1x128xf32, #tpu.memory_space<vmem>>, %arg17: memref<1x16x128xf32, #tpu.memory_space<vmem>>) attributes {dimension_semantics = [#tpu.dimension_semantics<parallel>, #tpu.dimension_semantics<arbitrary>], iteration_bounds = array<i64: 2, 3>, scalar_prefetch = 0 : i64, scratch_operands = 0 : i64, tpu.core_type = #tpu.core_type<tc>, window_params = [{transform_indices = @transform_0, window_bounds = array<i64: 1, 16, 128>}, {transform_indices = @transform_1, window_bounds = array<i64: 1, 1, 128>}, {transform_indices = @transform_2, window_bounds = array<i64: 1, 1, 128>}, {transform_indices = @transform_3, window_bounds = array<i64: 1, 128, 384>}, {transform_indices = @transform_4, window_bounds = array<i64: 1, 1, 384>}, {transform_indices = @transform_5, window_bounds = array<i64: 1, 128, 128>}, {transform_indices = @transform_6, window_bounds = array<i64: 1, 1, 128>}, {transform_indices = @transform_7, window_bounds = array<i64: 1, 1, 128>}, {transform_indices = @transform_8, window_bounds = array<i64: 1, 1, 128>}, {transform_indices = @transform_9, window_bounds = array<i64: 1, 128, 512>}, {transform_indices = @transform_10, window_bounds = array<i64: 1, 1, 512>}, {transform_indices = @transform_11, window_bounds = array<i64: 1, 512, 128>}, {transform_indices = @transform_12, window_bounds = array<i64: 1, 1, 128>}, {pipeline_mode = #tpu.pipeline_mode<synchronous>, transform_indices = @transform_13, window_bounds = array<i64: 1, 128>}, {pipeline_mode = #tpu.pipeline_mode<synchronous>, transform_indices = @transform_14, window_bounds = array<i64: 1, 128>}, {transform_indices = @transform_15, window_bounds = array<i64: 1, 16, 128>}]} {
    %c0_i32 = arith.constant 0 : i32
    %0 = arith.cmpi eq, %arg1, %c0_i32 : i32
    %1 = arith.extui %0 : i1 to i32
    %c0_i32_0 = arith.constant 0 : i32
    %2 = arith.cmpi ne, %1, %c0_i32_0 : i32
    scf.if %2 {
      %c0_88 = arith.constant 0 : index
      %c0_89 = arith.constant 0 : index
      %c0_90 = arith.constant 0 : index
      %202 = vector.load %arg2[%c0_88, %c0_89, %c0_90] : memref<1x16x128xf32, #tpu.memory_space<vmem>>, vector<1x16x128xf32>
      %c0_91 = arith.constant 0 : index
      %c0_92 = arith.constant 0 : index
      %c0_93 = arith.constant 0 : index
      %203 = vector.load %arg17[%c0_91, %c0_92, %c0_93] : memref<1x16x128xf32, #tpu.memory_space<vmem>>, vector<1x16x128xf32>
      tpu.vector_store %arg17[%c0_91, %c0_92, %c0_93], %202 {strides = array<i32>} : memref<1x16x128xf32, #tpu.memory_space<vmem>>, vector<1x16x128xf32>,
    } else {
    }
    %c0 = arith.constant 0 : index
    %c0_1 = arith.constant 0 : index
    %c0_2 = arith.constant 0 : index
    %3 = vector.load %arg17[%c0, %c0_1, %c0_2] : memref<1x16x128xf32, #tpu.memory_space<vmem>>, vector<1x16x128xf32>
    %4 = vector.shape_cast %3 : vector<1x16x128xf32> to vector<16x128xf32>
    %c0_3 = arith.constant 0 : index
    %c0_4 = arith.constant 0 : index
    %c0_5 = arith.constant 0 : index
    %5 = vector.load %arg3[%c0_3, %c0_4, %c0_5] : memref<1x1x128xf32, #tpu.memory_space<vmem>>, vector<1x1x128xf32>
    %6 = vector.shape_cast %5 : vector<1x1x128xf32> to vector<1x128xf32>
    %c0_6 = arith.constant 0 : index
    %c0_7 = arith.constant 0 : index
    %c0_8 = arith.constant 0 : index
    %7 = vector.load %arg4[%c0_6, %c0_7, %c0_8] : memref<1x1x128xf32, #tpu.memory_space<vmem>>, vector<1x1x128xf32>
    %8 = vector.shape_cast %7 : vector<1x1x128xf32> to vector<1x128xf32>
    %cst = arith.constant dense<0.000000e+00> : vector<16xf32>
    %9 = vector.multi_reduction <add>, %4, %cst [1] : vector<16x128xf32> to vector<16xf32>
    %10 = vector.shape_cast %9 : vector<16xf32> to vector<16x1xf32>
    %cst_9 = arith.constant 1.280000e+02 : f32
    %11 = vector.broadcast %cst_9 : f32 to vector<16x1xf32>
    %12 = arith.divf %10, %11 : vector<16x1xf32>
    %13 = vector.broadcast %12 : vector<16x1xf32> to vector<16x128xf32>
    %14 = arith.subf %4, %13 : vector<16x128xf32>
    %15 = arith.mulf %14, %14 : vector<16x128xf32>
    %cst_10 = arith.constant dense<0.000000e+00> : vector<16xf32>
    %16 = vector.multi_reduction <add>, %15, %cst_10 [1] : vector<16x128xf32> to vector<16xf32>
    %17 = vector.shape_cast %16 : vector<16xf32> to vector<16x1xf32>
    %cst_11 = arith.constant 1.280000e+02 : f32
    %18 = vector.broadcast %cst_11 : f32 to vector<16x1xf32>
    %19 = arith.divf %17, %18 : vector<16x1xf32>
    %20 = vector.broadcast %12 : vector<16x1xf32> to vector<16x128xf32>
    %21 = arith.subf %4, %20 : vector<16x128xf32>
    %cst_12 = arith.constant 9.99999974E-6 : f32
    %22 = vector.broadcast %cst_12 : f32 to vector<16x1xf32>
    %23 = arith.addf %19, %22 : vector<16x1xf32>
    %24 = math.rsqrt %23 : vector<16x1xf32>
    %25 = vector.broadcast %24 : vector<16x1xf32> to vector<16x128xf32>
    %26 = arith.mulf %21, %25 : vector<16x128xf32>
    %27 = vector.broadcast %6 : vector<1x128xf32> to vector<16x128xf32>
    %28 = arith.mulf %26, %27 : vector<16x128xf32>
    %29 = vector.broadcast %8 : vector<1x128xf32> to vector<16x128xf32>
    %30 = arith.addf %28, %29 : vector<16x128xf32>
    %31 = arith.truncf %30 : vector<16x128xf32> to vector<16x128xbf16>
    %c0_13 = arith.constant 0 : index
    %c0_14 = arith.constant 0 : index
    %c0_15 = arith.constant 0 : index
    %32 = vector.load %arg5[%c0_13, %c0_14, %c0_15] : memref<1x128x384xbf16, #tpu.memory_space<vmem>>, vector<1x128x384xbf16>
    %33 = vector.shape_cast %32 : vector<1x128x384xbf16> to vector<128x384xbf16>
    %cst_16 = arith.constant dense<0.000000e+00> : vector<16x384xf32>
    %34 = tpu.matmul %31, %33, %cst_16 {dimension_numbers = #tpu.dot_dimension_numbers<[1], [0], [0], [1], [0, 0, 1, 1], [], []>} : vector<16x128xbf16>, vector<128x384xbf16>, vector<16x384xf32> -> vector<16x384xf32>
    %c0_17 = arith.constant 0 : index
    %c0_18 = arith.constant 0 : index
    %c0_19 = arith.constant 0 : index
    %35 = vector.load %arg6[%c0_17, %c0_18, %c0_19] : memref<1x1x384xf32, #tpu.memory_space<vmem>>, vector<1x1x384xf32>
    %36 = vector.shape_cast %35 : vector<1x1x384xf32> to vector<1x384xf32>
    %37 = vector.broadcast %36 : vector<1x384xf32> to vector<16x384xf32>
    %38 = arith.addf %34, %37 : vector<16x384xf32>
    %39 = vector.extract_strided_slice %38 {offsets = [0, 0], sizes = [16, 128], strides = [1, 1]} : vector<16x384xf32> to vector<16x128xf32>
    %cst_20 = arith.constant 0.176776692 : f32
    %40 = vector.broadcast %cst_20 : f32 to vector<16x128xf32>
    %41 = arith.mulf %39, %40 : vector<16x128xf32>
    %42 = vector.extract_strided_slice %38 {offsets = [0, 128], sizes = [16, 128], strides = [1, 1]} : vector<16x384xf32> to vector<16x128xf32>
    %43 = vector.extract_strided_slice %38 {offsets = [0, 256], sizes = [16, 128], strides = [1, 1]} : vector<16x384xf32> to vector<16x128xf32>
    %44 = tpu.iota {dimensions = array<i32: 0>} : vector<16x16xi32>
    %45 = tpu.iota {dimensions = array<i32: 1>} : vector<16x16xi32>
    %46 = arith.cmpi sgt, %45, %44 : vector<16x16xi32>
    %cst_21 = arith.constant 0.000000e+00 : f32
    %47 = vector.broadcast %cst_21 : f32 to vector<16x128xf32>
    %48 = vector.extract_strided_slice %41 {offsets = [0, 0], sizes = [16, 32], strides = [1, 1]} : vector<16x128xf32> to vector<16x32xf32>
    %49 = vector.extract_strided_slice %42 {offsets = [0, 0], sizes = [16, 32], strides = [1, 1]} : vector<16x128xf32> to vector<16x32xf32>
    %50 = vector.extract_strided_slice %43 {offsets = [0, 0], sizes = [16, 32], strides = [1, 1]} : vector<16x128xf32> to vector<16x32xf32>
    %51 = tpu.transpose %49, [1, 0] : vector<16x32xf32> -> vector<32x16xf32>
    %cst_22 = arith.constant dense<0.000000e+00> : vector<16x16xf32>
    %52 = tpu.matmul %48, %51, %cst_22 {dimension_numbers = #tpu.dot_dimension_numbers<[1], [0], [0], [1], [0, 0, 1, 1], [], []>} : vector<16x32xf32>, vector<32x16xf32>, vector<16x16xf32> -> vector<16x16xf32>
    %cst_23 = arith.constant -1.000000e+30 : f32
    %53 = vector.broadcast %cst_23 : f32 to vector<16x16xf32>
    %54 = arith.select %46, %53, %52 : vector<16x16xi1>, vector<16x16xf32>
    %cst_24 = arith.constant dense<0xFF800000> : vector<16xf32>
    %55 = vector.multi_reduction <maximumf>, %54, %cst_24 [1] : vector<16x16xf32> to vector<16xf32>
    %56 = vector.shape_cast %55 : vector<16xf32> to vector<16x1xf32>
    %57 = vector.broadcast %56 : vector<16x1xf32> to vector<16x16xf32>
    %58 = arith.subf %54, %57 : vector<16x16xf32>
    %59 = math.exp %58 : vector<16x16xf32>
    %cst_25 = arith.constant dense<0.000000e+00> : vector<16xf32>
    %60 = vector.multi_reduction <add>, %59, %cst_25 [1] : vector<16x16xf32> to vector<16xf32>
    %61 = vector.shape_cast %60 : vector<16xf32> to vector<16x1xf32>
    %62 = tpu.reciprocal %61 {approx = true} : vector<16x1xf32> -> vector<16x1xf32>
    %63 = vector.broadcast %62 : vector<16x1xf32> to vector<16x16xf32>
    %64 = arith.mulf %59, %63 : vector<16x16xf32>
    %cst_26 = arith.constant dense<0.000000e+00> : vector<16x32xf32>
    %65 = tpu.matmul %64, %50, %cst_26 {dimension_numbers = #tpu.dot_dimension_numbers<[1], [0], [0], [1], [0, 0, 1, 1], [], []>} : vector<16x16xf32>, vector<16x32xf32>, vector<16x32xf32> -> vector<16x32xf32>
    %66 = arith.truncf %65 : vector<16x32xf32> to vector<16x32xbf16>
    %c0_27 = arith.constant 0 : index
    %c0_28 = arith.constant 0 : index
    %c0_29 = arith.constant 0 : index
    %67 = vector.load %arg7[%c0_27, %c0_28, %c0_29] : memref<1x128x128xbf16, #tpu.memory_space<vmem>>, vector<1x32x128xbf16>
    %68 = vector.shape_cast %67 : vector<1x32x128xbf16> to vector<32x128xbf16>
    %cst_30 = arith.constant dense<0.000000e+00> : vector<16x128xf32>
    %69 = tpu.matmul %66, %68, %cst_30 {dimension_numbers = #tpu.dot_dimension_numbers<[1], [0], [0], [1], [0, 0, 1, 1], [], []>} : vector<16x32xbf16>, vector<32x128xbf16>, vector<16x128xf32> -> vector<16x128xf32>
    %70 = arith.addf %47, %69 : vector<16x128xf32>
    %71 = vector.extract_strided_slice %41 {offsets = [0, 32], sizes = [16, 32], strides = [1, 1]} : vector<16x128xf32> to vector<16x32xf32>
    %72 = vector.extract_strided_slice %42 {offsets = [0, 32], sizes = [16, 32], strides = [1, 1]} : vector<16x128xf32> to vector<16x32xf32>
    %73 = vector.extract_strided_slice %43 {offsets = [0, 32], sizes = [16, 32], strides = [1, 1]} : vector<16x128xf32> to vector<16x32xf32>
    %74 = tpu.transpose %72, [1, 0] : vector<16x32xf32> -> vector<32x16xf32>
    %cst_31 = arith.constant dense<0.000000e+00> : vector<16x16xf32>
    %75 = tpu.matmul %71, %74, %cst_31 {dimension_numbers = #tpu.dot_dimension_numbers<[1], [0], [0], [1], [0, 0, 1, 1], [], []>} : vector<16x32xf32>, vector<32x16xf32>, vector<16x16xf32> -> vector<16x16xf32>
    %cst_32 = arith.constant -1.000000e+30 : f32
    %76 = vector.broadcast %cst_32 : f32 to vector<16x16xf32>
    %77 = arith.select %46, %76, %75 : vector<16x16xi1>, vector<16x16xf32>
    %cst_33 = arith.constant dense<0xFF800000> : vector<16xf32>
    %78 = vector.multi_reduction <maximumf>, %77, %cst_33 [1] : vector<16x16xf32> to vector<16xf32>
    %79 = vector.shape_cast %78 : vector<16xf32> to vector<16x1xf32>
    %80 = vector.broadcast %79 : vector<16x1xf32> to vector<16x16xf32>
    %81 = arith.subf %77, %80 : vector<16x16xf32>
    %82 = math.exp %81 : vector<16x16xf32>
    %cst_34 = arith.constant dense<0.000000e+00> : vector<16xf32>
    %83 = vector.multi_reduction <add>, %82, %cst_34 [1] : vector<16x16xf32> to vector<16xf32>
    %84 = vector.shape_cast %83 : vector<16xf32> to vector<16x1xf32>
    %85 = tpu.reciprocal %84 {approx = true} : vector<16x1xf32> -> vector<16x1xf32>
    %86 = vector.broadcast %85 : vector<16x1xf32> to vector<16x16xf32>
    %87 = arith.mulf %82, %86 : vector<16x16xf32>
    %cst_35 = arith.constant dense<0.000000e+00> : vector<16x32xf32>
    %88 = tpu.matmul %87, %73, %cst_35 {dimension_numbers = #tpu.dot_dimension_numbers<[1], [0], [0], [1], [0, 0, 1, 1], [], []>} : vector<16x16xf32>, vector<16x32xf32>, vector<16x32xf32> -> vector<16x32xf32>
    %89 = arith.truncf %88 : vector<16x32xf32> to vector<16x32xbf16>
    %c0_36 = arith.constant 0 : index
    %c32 = arith.constant 32 : index
    %c0_37 = arith.constant 0 : index
    %90 = vector.load %arg7[%c0_36, %c32, %c0_37] : memref<1x128x128xbf16, #tpu.memory_space<vmem>>, vector<1x32x128xbf16>
    %91 = vector.shape_cast %90 : vector<1x32x128xbf16> to vector<32x128xbf16>
    %cst_38 = arith.constant dense<0.000000e+00> : vector<16x128xf32>
    %92 = tpu.matmul %89, %91, %cst_38 {dimension_numbers = #tpu.dot_dimension_numbers<[1], [0], [0], [1], [0, 0, 1, 1], [], []>} : vector<16x32xbf16>, vector<32x128xbf16>, vector<16x128xf32> -> vector<16x128xf32>
    %93 = arith.addf %70, %92 : vector<16x128xf32>
    %94 = vector.extract_strided_slice %41 {offsets = [0, 64], sizes = [16, 32], strides = [1, 1]} : vector<16x128xf32> to vector<16x32xf32>
    %95 = vector.extract_strided_slice %42 {offsets = [0, 64], sizes = [16, 32], strides = [1, 1]} : vector<16x128xf32> to vector<16x32xf32>
    %96 = vector.extract_strided_slice %43 {offsets = [0, 64], sizes = [16, 32], strides = [1, 1]} : vector<16x128xf32> to vector<16x32xf32>
    %97 = tpu.transpose %95, [1, 0] : vector<16x32xf32> -> vector<32x16xf32>
    %cst_39 = arith.constant dense<0.000000e+00> : vector<16x16xf32>
    %98 = tpu.matmul %94, %97, %cst_39 {dimension_numbers = #tpu.dot_dimension_numbers<[1], [0], [0], [1], [0, 0, 1, 1], [], []>} : vector<16x32xf32>, vector<32x16xf32>, vector<16x16xf32> -> vector<16x16xf32>
    %cst_40 = arith.constant -1.000000e+30 : f32
    %99 = vector.broadcast %cst_40 : f32 to vector<16x16xf32>
    %100 = arith.select %46, %99, %98 : vector<16x16xi1>, vector<16x16xf32>
    %cst_41 = arith.constant dense<0xFF800000> : vector<16xf32>
    %101 = vector.multi_reduction <maximumf>, %100, %cst_41 [1] : vector<16x16xf32> to vector<16xf32>
    %102 = vector.shape_cast %101 : vector<16xf32> to vector<16x1xf32>
    %103 = vector.broadcast %102 : vector<16x1xf32> to vector<16x16xf32>
    %104 = arith.subf %100, %103 : vector<16x16xf32>
    %105 = math.exp %104 : vector<16x16xf32>
    %cst_42 = arith.constant dense<0.000000e+00> : vector<16xf32>
    %106 = vector.multi_reduction <add>, %105, %cst_42 [1] : vector<16x16xf32> to vector<16xf32>
    %107 = vector.shape_cast %106 : vector<16xf32> to vector<16x1xf32>
    %108 = tpu.reciprocal %107 {approx = true} : vector<16x1xf32> -> vector<16x1xf32>
    %109 = vector.broadcast %108 : vector<16x1xf32> to vector<16x16xf32>
    %110 = arith.mulf %105, %109 : vector<16x16xf32>
    %cst_43 = arith.constant dense<0.000000e+00> : vector<16x32xf32>
    %111 = tpu.matmul %110, %96, %cst_43 {dimension_numbers = #tpu.dot_dimension_numbers<[1], [0], [0], [1], [0, 0, 1, 1], [], []>} : vector<16x16xf32>, vector<16x32xf32>, vector<16x32xf32> -> vector<16x32xf32>
    %112 = arith.truncf %111 : vector<16x32xf32> to vector<16x32xbf16>
    %c0_44 = arith.constant 0 : index
    %c64 = arith.constant 64 : index
    %c0_45 = arith.constant 0 : index
    %113 = vector.load %arg7[%c0_44, %c64, %c0_45] : memref<1x128x128xbf16, #tpu.memory_space<vmem>>, vector<1x32x128xbf16>
    %114 = vector.shape_cast %113 : vector<1x32x128xbf16> to vector<32x128xbf16>
    %cst_46 = arith.constant dense<0.000000e+00> : vector<16x128xf32>
    %115 = tpu.matmul %112, %114, %cst_46 {dimension_numbers = #tpu.dot_dimension_numbers<[1], [0], [0], [1], [0, 0, 1, 1], [], []>} : vector<16x32xbf16>, vector<32x128xbf16>, vector<16x128xf32> -> vector<16x128xf32>
    %116 = arith.addf %93, %115 : vector<16x128xf32>
    %117 = vector.extract_strided_slice %41 {offsets = [0, 96], sizes = [16, 32], strides = [1, 1]} : vector<16x128xf32> to vector<16x32xf32>
    %118 = vector.extract_strided_slice %42 {offsets = [0, 96], sizes = [16, 32], strides = [1, 1]} : vector<16x128xf32> to vector<16x32xf32>
    %119 = vector.extract_strided_slice %43 {offsets = [0, 96], sizes = [16, 32], strides = [1, 1]} : vector<16x128xf32> to vector<16x32xf32>
    %120 = tpu.transpose %118, [1, 0] : vector<16x32xf32> -> vector<32x16xf32>
    %cst_47 = arith.constant dense<0.000000e+00> : vector<16x16xf32>
    %121 = tpu.matmul %117, %120, %cst_47 {dimension_numbers = #tpu.dot_dimension_numbers<[1], [0], [0], [1], [0, 0, 1, 1], [], []>} : vector<16x32xf32>, vector<32x16xf32>, vector<16x16xf32> -> vector<16x16xf32>
    %cst_48 = arith.constant -1.000000e+30 : f32
    %122 = vector.broadcast %cst_48 : f32 to vector<16x16xf32>
    %123 = arith.select %46, %122, %121 : vector<16x16xi1>, vector<16x16xf32>
    %cst_49 = arith.constant dense<0xFF800000> : vector<16xf32>
    %124 = vector.multi_reduction <maximumf>, %123, %cst_49 [1] : vector<16x16xf32> to vector<16xf32>
    %125 = vector.shape_cast %124 : vector<16xf32> to vector<16x1xf32>
    %126 = vector.broadcast %125 : vector<16x1xf32> to vector<16x16xf32>
    %127 = arith.subf %123, %126 : vector<16x16xf32>
    %128 = math.exp %127 : vector<16x16xf32>
    %cst_50 = arith.constant dense<0.000000e+00> : vector<16xf32>
    %129 = vector.multi_reduction <add>, %128, %cst_50 [1] : vector<16x16xf32> to vector<16xf32>
    %130 = vector.shape_cast %129 : vector<16xf32> to vector<16x1xf32>
    %131 = tpu.reciprocal %130 {approx = true} : vector<16x1xf32> -> vector<16x1xf32>
    %132 = vector.broadcast %131 : vector<16x1xf32> to vector<16x16xf32>
    %133 = arith.mulf %128, %132 : vector<16x16xf32>
    %cst_51 = arith.constant dense<0.000000e+00> : vector<16x32xf32>
    %134 = tpu.matmul %133, %119, %cst_51 {dimension_numbers = #tpu.dot_dimension_numbers<[1], [0], [0], [1], [0, 0, 1, 1], [], []>} : vector<16x16xf32>, vector<16x32xf32>, vector<16x32xf32> -> vector<16x32xf32>
    %135 = arith.truncf %134 : vector<16x32xf32> to vector<16x32xbf16>
    %c0_52 = arith.constant 0 : index
    %c96 = arith.constant 96 : index
    %c0_53 = arith.constant 0 : index
    %136 = vector.load %arg7[%c0_52, %c96, %c0_53] : memref<1x128x128xbf16, #tpu.memory_space<vmem>>, vector<1x32x128xbf16>
    %137 = vector.shape_cast %136 : vector<1x32x128xbf16> to vector<32x128xbf16>
    %cst_54 = arith.constant dense<0.000000e+00> : vector<16x128xf32>
    %138 = tpu.matmul %135, %137, %cst_54 {dimension_numbers = #tpu.dot_dimension_numbers<[1], [0], [0], [1], [0, 0, 1, 1], [], []>} : vector<16x32xbf16>, vector<32x128xbf16>, vector<16x128xf32> -> vector<16x128xf32>
    %139 = arith.addf %116, %138 : vector<16x128xf32>
    %140 = arith.addf %4, %139 : vector<16x128xf32>
    %c0_55 = arith.constant 0 : index
    %c0_56 = arith.constant 0 : index
    %c0_57 = arith.constant 0 : index
    %141 = vector.load %arg8[%c0_55, %c0_56, %c0_57] : memref<1x1x128xf32, #tpu.memory_space<vmem>>, vector<1x1x128xf32>
    %142 = vector.shape_cast %141 : vector<1x1x128xf32> to vector<1x128xf32>
    %143 = vector.broadcast %142 : vector<1x128xf32> to vector<16x128xf32>
    %144 = arith.addf %140, %143 : vector<16x128xf32>
    %c0_58 = arith.constant 0 : index
    %c0_59 = arith.constant 0 : index
    %c0_60 = arith.constant 0 : index
    %145 = vector.load %arg9[%c0_58, %c0_59, %c0_60] : memref<1x1x128xf32, #tpu.memory_space<vmem>>, vector<1x1x128xf32>
    %146 = vector.shape_cast %145 : vector<1x1x128xf32> to vector<1x128xf32>
    %c0_61 = arith.constant 0 : index
    %c0_62 = arith.constant 0 : index
    %c0_63 = arith.constant 0 : index
    %147 = vector.load %arg10[%c0_61, %c0_62, %c0_63] : memref<1x1x128xf32, #tpu.memory_space<vmem>>, vector<1x1x128xf32>
    %148 = vector.shape_cast %147 : vector<1x1x128xf32> to vector<1x128xf32>
    %cst_64 = arith.constant dense<0.000000e+00> : vector<16xf32>
    %149 = vector.multi_reduction <add>, %144, %cst_64 [1] : vector<16x128xf32> to vector<16xf32>
    %150 = vector.shape_cast %149 : vector<16xf32> to vector<16x1xf32>
    %cst_65 = arith.constant 1.280000e+02 : f32
    %151 = vector.broadcast %cst_65 : f32 to vector<16x1xf32>
    %152 = arith.divf %150, %151 : vector<16x1xf32>
    %153 = vector.broadcast %152 : vector<16x1xf32> to vector<16x128xf32>
    %154 = arith.subf %144, %153 : vector<16x128xf32>
    %155 = arith.mulf %154, %154 : vector<16x128xf32>
    %cst_66 = arith.constant dense<0.000000e+00> : vector<16xf32>
    %156 = vector.multi_reduction <add>, %155, %cst_66 [1] : vector<16x128xf32> to vector<16xf32>
    %157 = vector.shape_cast %156 : vector<16xf32> to vector<16x1xf32>
    %cst_67 = arith.constant 1.280000e+02 : f32
    %158 = vector.broadcast %cst_67 : f32 to vector<16x1xf32>
    %159 = arith.divf %157, %158 : vector<16x1xf32>
    %160 = vector.broadcast %152 : vector<16x1xf32> to vector<16x128xf32>
    %161 = arith.subf %144, %160 : vector<16x128xf32>
    %cst_68 = arith.constant 9.99999974E-6 : f32
    %162 = vector.broadcast %cst_68 : f32 to vector<16x1xf32>
    %163 = arith.addf %159, %162 : vector<16x1xf32>
    %164 = math.rsqrt %163 : vector<16x1xf32>
    %165 = vector.broadcast %164 : vector<16x1xf32> to vector<16x128xf32>
    %166 = arith.mulf %161, %165 : vector<16x128xf32>
    %167 = vector.broadcast %146 : vector<1x128xf32> to vector<16x128xf32>
    %168 = arith.mulf %166, %167 : vector<16x128xf32>
    %169 = vector.broadcast %148 : vector<1x128xf32> to vector<16x128xf32>
    %170 = arith.addf %168, %169 : vector<16x128xf32>
    %171 = arith.truncf %170 : vector<16x128xf32> to vector<16x128xbf16>
    %c0_69 = arith.constant 0 : index
    %c0_70 = arith.constant 0 : index
    %c0_71 = arith.constant 0 : index
    %172 = vector.load %arg11[%c0_69, %c0_70, %c0_71] : memref<1x128x512xbf16, #tpu.memory_space<vmem>>, vector<1x128x512xbf16>
    %173 = vector.shape_cast %172 : vector<1x128x512xbf16> to vector<128x512xbf16>
    %cst_72 = arith.constant dense<0.000000e+00> : vector<16x512xf32>
    %174 = tpu.matmul %171, %173, %cst_72 {dimension_numbers = #tpu.dot_dimension_numbers<[1], [0], [0], [1], [0, 0, 1, 1], [], []>} : vector<16x128xbf16>, vector<128x512xbf16>, vector<16x512xf32> -> vector<16x512xf32>
    %c0_73 = arith.constant 0 : index
    %c0_74 = arith.constant 0 : index
    %c0_75 = arith.constant 0 : index
    %175 = vector.load %arg12[%c0_73, %c0_74, %c0_75] : memref<1x1x512xf32, #tpu.memory_space<vmem>>, vector<1x1x512xf32>
    %176 = vector.shape_cast %175 : vector<1x1x512xf32> to vector<1x512xf32>
    %177 = vector.broadcast %176 : vector<1x512xf32> to vector<16x512xf32>
    %178 = arith.addf %174, %177 : vector<16x512xf32>
    %cst_76 = arith.constant 1.702000e+00 : f32
    %179 = vector.broadcast %cst_76 : f32 to vector<16x512xf32>
    %180 = arith.mulf %179, %178 : vector<16x512xf32>
    %181 = arith.negf %180 : vector<16x512xf32>
    %182 = math.exp %181 : vector<16x512xf32>
    %cst_77 = arith.constant 1.000000e+00 : f32
    %183 = vector.broadcast %cst_77 : f32 to vector<16x512xf32>
    %184 = arith.addf %183, %182 : vector<16x512xf32>
    %185 = arith.divf %183, %184 : vector<16x512xf32>
    %186 = arith.mulf %178, %185 : vector<16x512xf32>
    %187 = arith.truncf %186 : vector<16x512xf32> to vector<16x512xbf16>
    %c0_78 = arith.constant 0 : index
    %c0_79 = arith.constant 0 : index
    %c0_80 = arith.constant 0 : index
    %188 = vector.load %arg13[%c0_78, %c0_79, %c0_80] : memref<1x512x128xbf16, #tpu.memory_space<vmem>>, vector<1x512x128xbf16>
    %189 = vector.shape_cast %188 : vector<1x512x128xbf16> to vector<512x128xbf16>
    %cst_81 = arith.constant dense<0.000000e+00> : vector<16x128xf32>
    %190 = tpu.matmul %187, %189, %cst_81 {dimension_numbers = #tpu.dot_dimension_numbers<[1], [0], [0], [1], [0, 0, 1, 1], [], []>} : vector<16x512xbf16>, vector<512x128xbf16>, vector<16x128xf32> -> vector<16x128xf32>
    %c0_82 = arith.constant 0 : index
    %c0_83 = arith.constant 0 : index
    %c0_84 = arith.constant 0 : index
    %191 = vector.load %arg14[%c0_82, %c0_83, %c0_84] : memref<1x1x128xf32, #tpu.memory_space<vmem>>, vector<1x1x128xf32>
    %192 = vector.shape_cast %191 : vector<1x1x128xf32> to vector<1x128xf32>
    %193 = vector.broadcast %192 : vector<1x128xf32> to vector<16x128xf32>
    %194 = arith.addf %190, %193 : vector<16x128xf32>
    %195 = arith.addf %144, %194 : vector<16x128xf32>
    %c2_i32 = arith.constant 2 : i32
    %196 = arith.cmpi ne, %arg1, %c2_i32 : i32
    %197 = arith.extui %196 : i1 to i32
    %c0_i32_85 = arith.constant 0 : i32
    %198 = arith.cmpi ne, %197, %c0_i32_85 : i32
    scf.if %198 {
      %c0_88 = arith.constant 0 : index
      %c0_89 = arith.constant 0 : index
      %c0_90 = arith.constant 0 : index
      %202 = vector.load %arg17[%c0_88, %c0_89, %c0_90] : memref<1x16x128xf32, #tpu.memory_space<vmem>>, vector<1x16x128xf32>
      %203 = vector.shape_cast %202 : vector<1x16x128xf32> to vector<16x128xf32>
      %204 = vector.shape_cast %195 : vector<16x128xf32> to vector<1x16x128xf32>
      tpu.vector_store %arg17[%c0_88, %c0_89, %c0_90], %204 {strides = array<i32>} : memref<1x16x128xf32, #tpu.memory_space<vmem>>, vector<1x16x128xf32>,
    } else {
    }
    %c2_i32_86 = arith.constant 2 : i32
    %199 = arith.cmpi eq, %arg1, %c2_i32_86 : i32
    %200 = arith.extui %199 : i1 to i32
    %c0_i32_87 = arith.constant 0 : i32
    %201 = arith.cmpi ne, %200, %c0_i32_87 : i32
    scf.if %201 {
      %c0_88 = arith.constant 0 : index
      %c0_89 = arith.constant 0 : index
      %202 = vector.load %arg15[%c0_88, %c0_89] : memref<1x128xf32, #tpu.memory_space<vmem>>, vector<1x128xf32>
      %c0_90 = arith.constant 0 : index
      %c0_91 = arith.constant 0 : index
      %203 = vector.load %arg16[%c0_90, %c0_91] : memref<1x128xf32, #tpu.memory_space<vmem>>, vector<1x128xf32>
      %cst_92 = arith.constant dense<0.000000e+00> : vector<16xf32>
      %204 = vector.multi_reduction <add>, %195, %cst_92 [1] : vector<16x128xf32> to vector<16xf32>
      %205 = vector.shape_cast %204 : vector<16xf32> to vector<16x1xf32>
      %cst_93 = arith.constant 1.280000e+02 : f32
      %206 = vector.broadcast %cst_93 : f32 to vector<16x1xf32>
      %207 = arith.divf %205, %206 : vector<16x1xf32>
      %208 = vector.broadcast %207 : vector<16x1xf32> to vector<16x128xf32>
      %209 = arith.subf %195, %208 : vector<16x128xf32>
      %210 = arith.mulf %209, %209 : vector<16x128xf32>
      %cst_94 = arith.constant dense<0.000000e+00> : vector<16xf32>
      %211 = vector.multi_reduction <add>, %210, %cst_94 [1] : vector<16x128xf32> to vector<16xf32>
      %212 = vector.shape_cast %211 : vector<16xf32> to vector<16x1xf32>
      %cst_95 = arith.constant 1.280000e+02 : f32
      %213 = vector.broadcast %cst_95 : f32 to vector<16x1xf32>
      %214 = arith.divf %212, %213 : vector<16x1xf32>
      %215 = vector.broadcast %207 : vector<16x1xf32> to vector<16x128xf32>
      %216 = arith.subf %195, %215 : vector<16x128xf32>
      %cst_96 = arith.constant 9.99999974E-6 : f32
      %217 = vector.broadcast %cst_96 : f32 to vector<16x1xf32>
      %218 = arith.addf %214, %217 : vector<16x1xf32>
      %219 = math.rsqrt %218 : vector<16x1xf32>
      %220 = vector.broadcast %219 : vector<16x1xf32> to vector<16x128xf32>
      %221 = arith.mulf %216, %220 : vector<16x128xf32>
      %222 = vector.broadcast %202 : vector<1x128xf32> to vector<16x128xf32>
      %223 = arith.mulf %221, %222 : vector<16x128xf32>
      %224 = vector.broadcast %203 : vector<1x128xf32> to vector<16x128xf32>
      %225 = arith.addf %223, %224 : vector<16x128xf32>
      %c0_97 = arith.constant 0 : index
      %c0_98 = arith.constant 0 : index
      %c0_99 = arith.constant 0 : index
      %226 = vector.load %arg17[%c0_97, %c0_98, %c0_99] : memref<1x16x128xf32, #tpu.memory_space<vmem>>, vector<1x16x128xf32>
      %227 = vector.shape_cast %226 : vector<1x16x128xf32> to vector<16x128xf32>
      %228 = vector.shape_cast %225 : vector<16x128xf32> to vector<1x16x128xf32>
      tpu.vector_store %arg17[%c0_97, %c0_98, %c0_99], %228 {strides = array<i32>} : memref<1x16x128xf32, #tpu.memory_space<vmem>>, vector<1x16x128xf32>,
    } else {
    }
    return
  }
  func.func @transform_0(%arg0: i32, %arg1: i32) -> (i32, i32, i32) {
    %c0_i32 = arith.constant 0 : i32
    %c0_i32_0 = arith.constant 0 : i32
    %c0_i32_1 = arith.constant 0 : i32
    return %arg0, %c0_i32, %c0_i32_0 : i32, i32, i32
  }
  func.func @transform_1(%arg0: i32, %arg1: i32) -> (i32, i32, i32) {
    %c0_i32 = arith.constant 0 : i32
    %c0_i32_0 = arith.constant 0 : i32
    %c0_i32_1 = arith.constant 0 : i32
    return %arg1, %c0_i32, %c0_i32_0 : i32, i32, i32
  }
  func.func @transform_2(%arg0: i32, %arg1: i32) -> (i32, i32, i32) {
    %c0_i32 = arith.constant 0 : i32
    %c0_i32_0 = arith.constant 0 : i32
    %c0_i32_1 = arith.constant 0 : i32
    return %arg1, %c0_i32, %c0_i32_0 : i32, i32, i32
  }
  func.func @transform_3(%arg0: i32, %arg1: i32) -> (i32, i32, i32) {
    %c0_i32 = arith.constant 0 : i32
    %c0_i32_0 = arith.constant 0 : i32
    %c0_i32_1 = arith.constant 0 : i32
    return %arg1, %c0_i32, %c0_i32_0 : i32, i32, i32
  }
  func.func @transform_4(%arg0: i32, %arg1: i32) -> (i32, i32, i32) {
    %c0_i32 = arith.constant 0 : i32
    %c0_i32_0 = arith.constant 0 : i32
    %c0_i32_1 = arith.constant 0 : i32
    return %arg1, %c0_i32, %c0_i32_0 : i32, i32, i32
  }
  func.func @transform_5(%arg0: i32, %arg1: i32) -> (i32, i32, i32) {
    %c0_i32 = arith.constant 0 : i32
    %c0_i32_0 = arith.constant 0 : i32
    %c0_i32_1 = arith.constant 0 : i32
    return %arg1, %c0_i32, %c0_i32_0 : i32, i32, i32
  }
  func.func @transform_6(%arg0: i32, %arg1: i32) -> (i32, i32, i32) {
    %c0_i32 = arith.constant 0 : i32
    %c0_i32_0 = arith.constant 0 : i32
    %c0_i32_1 = arith.constant 0 : i32
    return %arg1, %c0_i32, %c0_i32_0 : i32, i32, i32
  }
  func.func @transform_7(%arg0: i32, %arg1: i32) -> (i32, i32, i32) {
    %c0_i32 = arith.constant 0 : i32
    %c0_i32_0 = arith.constant 0 : i32
    %c0_i32_1 = arith.constant 0 : i32
    return %arg1, %c0_i32, %c0_i32_0 : i32, i32, i32
  }
  func.func @transform_8(%arg0: i32, %arg1: i32) -> (i32, i32, i32) {
    %c0_i32 = arith.constant 0 : i32
    %c0_i32_0 = arith.constant 0 : i32
    %c0_i32_1 = arith.constant 0 : i32
    return %arg1, %c0_i32, %c0_i32_0 : i32, i32, i32
  }
  func.func @transform_9(%arg0: i32, %arg1: i32) -> (i32, i32, i32) {
    %c0_i32 = arith.constant 0 : i32
    %c0_i32_0 = arith.constant 0 : i32
    %c0_i32_1 = arith.constant 0 : i32
    return %arg1, %c0_i32, %c0_i32_0 : i32, i32, i32
  }
  func.func @transform_10(%arg0: i32, %arg1: i32) -> (i32, i32, i32) {
    %c0_i32 = arith.constant 0 : i32
    %c0_i32_0 = arith.constant 0 : i32
    %c0_i32_1 = arith.constant 0 : i32
    return %arg1, %c0_i32, %c0_i32_0 : i32, i32, i32
  }
  func.func @transform_11(%arg0: i32, %arg1: i32) -> (i32, i32, i32) {
    %c0_i32 = arith.constant 0 : i32
    %c0_i32_0 = arith.constant 0 : i32
    %c0_i32_1 = arith.constant 0 : i32
    return %arg1, %c0_i32, %c0_i32_0 : i32, i32, i32
  }
  func.func @transform_12(%arg0: i32, %arg1: i32) -> (i32, i32, i32) {
    %c0_i32 = arith.constant 0 : i32
    %c0_i32_0 = arith.constant 0 : i32
    %c0_i32_1 = arith.constant 0 : i32
    return %arg1, %c0_i32, %c0_i32_0 : i32, i32, i32
  }
  func.func @transform_13(%arg0: i32, %arg1: i32) -> (i32, i32) {
    %c0_i32 = arith.constant 0 : i32
    %c0_i32_0 = arith.constant 0 : i32
    %c0_i32_1 = arith.constant 0 : i32
    return %c0_i32, %c0_i32_0 : i32, i32
  }
  func.func @transform_14(%arg0: i32, %arg1: i32) -> (i32, i32) {
    %c0_i32 = arith.constant 0 : i32
    %c0_i32_0 = arith.constant 0 : i32
    %c0_i32_1 = arith.constant 0 : i32
    return %c0_i32, %c0_i32_0 : i32, i32
  }
  func.func @transform_15(%arg0: i32, %arg1: i32) -> (i32, i32, i32) {
    %c0_i32 = arith.constant 0 : i32
    %c0_i32_0 = arith.constant 0 : i32
    %c0_i32_1 = arith.constant 0 : i32
    return %arg0, %c0_i32, %c0_i32_0 : i32, i32, i32
  }
}

</mosaic_0001>

<llo_original>
// kernel: clip_forward.1
$region0: #{clip_forward.1}
  #allocation0 [shape = 'u32[]', space=smem, size = 0x4, offset = 0x4, fixed_abs, tag = 'smem constant byte address 0x4 - core index']
  #allocation1 [shape = 'u32[72,128]{1,0:T(1,128)}', space=vmem, size = 0x9000, scoped, tag = 'internal scratch']
  %s0 = inlined_call_operand.vmem [shape: f32[2,16,128], index: 0, kind: input, shape index: {}]
  %s1 = inlined_call_operand.vmem [shape: f32[3,1,128], index: 1, kind: input, shape index: {}]
  %s2 = inlined_call_operand.vmem [shape: f32[3,1,128], index: 2, kind: input, shape index: {}]
  %s3 = inlined_call_operand.hbm [shape: bf16[3,128,384], index: 3, kind: input, shape index: {}]
  %s4 = inlined_call_operand.vmem [shape: f32[3,1,384], index: 4, kind: input, shape index: {}]
  %s5 = inlined_call_operand.vmem [shape: bf16[3,128,128], index: 5, kind: input, shape index: {}]
  %s6 = inlined_call_operand.vmem [shape: f32[3,1,128], index: 6, kind: input, shape index: {}]
  %s7 = inlined_call_operand.vmem [shape: f32[3,1,128], index: 7, kind: input, shape index: {}]
  %s8 = inlined_call_operand.vmem [shape: f32[3,1,128], index: 8, kind: input, shape index: {}]
  %s9 = inlined_call_operand.hbm [shape: bf16[3,128,512], index: 9, kind: input, shape index: {}]
  %s10 = inlined_call_operand.vmem [shape: f32[3,1,512], index: 10, kind: input, shape index: {}]
  %s11 = inlined_call_operand.hbm [shape: bf16[3,512,128], index: 11, kind: input, shape index: {}]
  %s12 = inlined_call_operand.vmem [shape: f32[3,1,128], index: 12, kind: input, shape index: {}]
  %s13 = inlined_call_operand.vmem [shape: f32[1,128], index: 13, kind: input, shape index: {}]
  %s14 = inlined_call_operand.vmem [shape: f32[1,128], index: 14, kind: input, shape index: {}]
  %s15 = inlined_call_operand.vmem [shape: f32[2,16,128], index: 15, kind: output, shape index: {}]
  %s16 = sld [smem:[#allocation0]]
  $region117: #{clip_forward.1} parent=0
    _
  %s18 = ssub.s32 1, %s16
  %s19 = scalar_select 0, %s18, %s16
  $region1: #{clip_forward.1} parent=0
    #allocation2 [shape = 'u8[196608]{0}', space=vmem, size = 0x30000, scoped, tag = 'input window, operand 3']
    #allocation3 [shape = 's32[2]{0}', space=sflag, size = 0x8, scoped, tag = 'scoped memory for clip_forward.1']
    #allocation4 [shape = 'u8[262144]{0}', space=vmem, size = 0x40000, scoped, tag = 'input window, operand 9']
    #allocation5 [shape = 's32[2]{0}', space=sflag, size = 0x8, scoped, tag = 'scoped memory for clip_forward.1']
    #allocation6 [shape = 'u8[262144]{0}', space=vmem, size = 0x40000, scoped, tag = 'input window, operand 11']
    %20 = vsyncpa [#allocation3], 0
    %s21 = scalar_lea.sflag [#allocation3], 1
    %22 = vsyncpa %s21, 0
    %23 = vsyncpa [#allocation5], 0
    %s24 = scalar_lea.sflag [#allocation5], 1
    %25 = vsyncpa %s24, 0
    loop: start=0, step=1, limit=8
    $region2: #{clip_forward.1} parent=1 // loop_pre_header
      _
    $region3: #{clip_forward.1} parent=1 // loop_header
      %s27 = sphi 0, %s31
      %p28 = scmp.ge.s32.totalorder %s27, 8
      %s34 = sphi 0, %s46
      %s35 = sphi 0, %s42
      %s36 = sphi 0, %s34
      %s37 = sphi 0, %s35
      %s38 = sphi 0, %s36
      %s39 = sphi 0, %s37
      %s49 = sphi 0, %s51
      %s52 = sphi 0, %s49
      %s53 = sphi 0, %s52
      %s69 = sphi 0, %s53
      %s75 = sphi 0, %s77
      %s78 = sphi 0, %s75
      %s79 = sphi 0, %s78
      %s95 = sphi 0, %s79
      %s101 = sphi 0, %s103
      %s104 = sphi 0, %s101
      %s105 = sphi 0, %s104
      %s121 = sphi 0, %s105
      %s127 = sphi 0, %s129
      %s130 = sphi 0, %s127
      %s131 = sphi 0, %s130
      %s147 = sphi 0, %s131
      %s153 = sphi 0, %s155
      %s156 = sphi 0, %s153
      %s157 = sphi 0, %s156
      %s173 = sphi 0, %s157
      %s179 = sphi 0, %s181
      %s182 = sphi 0, %s179
      %s183 = sphi 0, %s182
      %s199 = sphi 0, %s183
      %s205 = sphi 0, %s207
      %s208 = sphi 0, %s205
      %s209 = sphi 0, %s208
      %s225 = sphi 0, %s209
      %s231 = sphi 0, %s233
      %s234 = sphi 0, %s231
      %s235 = sphi 0, %s234
      %s251 = sphi 0, %s235
      %s257 = sphi 0, %s259
      %s260 = sphi 0, %s257
      %s261 = sphi 0, %s260
      %s277 = sphi 0, %s261
      %s283 = sphi 0, %s285
      %s286 = sphi 0, %s283
      %s287 = sphi 0, %s286
      %s303 = sphi 0, %s287
      %s309 = sphi 0, %s311
      %s312 = sphi 0, %s309
      %s313 = sphi 0, %s312
      %s329 = sphi 0, %s313
      %s335 = sphi 0, %s337
      %s338 = sphi 0, %s335
      %s339 = sphi 0, %s338
      %s355 = sphi 0, %s339
      %s361 = sphi 0, %s363
      %s364 = sphi 0, %s361
      %s365 = sphi 0, %s364
      %s381 = sphi 0, %s365
      %s385 = sphi 0, %s385
      %s387 = sphi 0, %s385
      %s388 = sphi 0, %s387
      %s402 = sphi 0, %s388
      %s406 = sphi 0, %s406
      %s408 = sphi 0, %s406
      %s409 = sphi 0, %s408
      %s423 = sphi 0, %s409
      %s429 = sphi 0, %s431
      %s432 = sphi 0, %s429
      %s433 = sphi 0, %s432
      %s449 = sphi 0, %s433
    $region4: #{clip_forward.1} parent=1 // loop_header_branch
      %30 = sbr.rel (%p28) target = $region8
    $region5: #{clip_forward.1} parent=1 // loop_body
      %s32 = ssub.s32 %s27, 1
      %s33 = ssub.s32 %s27, 2
      %s40 = sadd.s32 1, %s35
      %p41 = scmp.ge.s32.totalorder %s40, 3
      %s42 = scalar_select %p41, 0, %s40
      %s43 = sadd.s32 1, %s34
      %s44 = scalar_select %p41, %s43, %s34
      %p45 = scmp.ge.s32.totalorder %s44, 2
      %s46 = scalar_select %p45, 0, %s44
      %s47 = ssub.s32 %s34, %s46
      %p48 = scmp.eq.s32.totalorder %s47, 0
      %s50 = sadd.s32 %s49, 1
      %s51 = scalar_select %p48, %s49, %s50
      %p54 = pneg %p48
      %p55 = scmp.eq.s32.totalorder %s27, 5
      %p56 = por %p54, %p55
      %p57 = scmp.ne.s32.totalorder %s49, %s52
      %p58 = scmp.eq.s32.totalorder %s27, 0
      %p59 = por %p57, %p58
      %p60 = scmp.ne.s32.totalorder %s49, %s52
      %p61 = scmp.eq.s32.totalorder %s32, 5
      %p62 = por %p60, %p61
      %p63 = scmp.ne.s32.totalorder %s52, %s53
      %p64 = scmp.eq.s32.totalorder %s32, 0
      %p65 = por %p63, %p64
      %p66 = scmp.ne.s32.totalorder %s52, %s53
      %p67 = scmp.eq.s32.totalorder %s33, 5
      %p68 = por %p66, %p67
      %p70 = scmp.ne.s32.totalorder %s53, %s69
      %p71 = scmp.eq.s32.totalorder %s33, 0
      %p72 = por %p70, %p71
      %s73 = ssub.s32 %s35, %s42
      %p74 = scmp.eq.s32.totalorder %s73, 0
      %s76 = sadd.s32 %s75, 1
      %s77 = scalar_select %p74, %s75, %s76
      %p80 = pneg %p74
      %p81 = scmp.eq.s32.totalorder %s27, 5
      %p82 = por %p80, %p81
      %p83 = scmp.ne.s32.totalorder %s75, %s78
      %p84 = scmp.eq.s32.totalorder %s27, 0
      %p85 = por %p83, %p84
      %p86 = scmp.ne.s32.totalorder %s75, %s78
      %p87 = scmp.eq.s32.totalorder %s32, 5
      %p88 = por %p86, %p87
      %p89 = scmp.ne.s32.totalorder %s78, %s79
      %p90 = scmp.eq.s32.totalorder %s32, 0
      %p91 = por %p89, %p90
      %p92 = scmp.ne.s32.totalorder %s78, %s79
      %p93 = scmp.eq.s32.totalorder %s33, 5
      %p94 = por %p92, %p93
      %p96 = scmp.ne.s32.totalorder %s79, %s95
      %p97 = scmp.eq.s32.totalorder %s33, 0
      %p98 = por %p96, %p97
      %s99 = ssub.s32 %s35, %s42
      %p100 = scmp.eq.s32.totalorder %s99, 0
      %s102 = sadd.s32 %s101, 1
      %s103 = scalar_select %p100, %s101, %s102
      %p106 = pneg %p100
      %p107 = scmp.eq.s32.totalorder %s27, 5
      %p108 = por %p106, %p107
      %p109 = scmp.ne.s32.totalorder %s101, %s104
      %p110 = scmp.eq.s32.totalorder %s27, 0
      %p111 = por %p109, %p110
      %p112 = scmp.ne.s32.totalorder %s101, %s104
      %p113 = scmp.eq.s32.totalorder %s32, 5
      %p114 = por %p112, %p113
      %p115 = scmp.ne.s32.totalorder %s104, %s105
      %p116 = scmp.eq.s32.totalorder %s32, 0
      %p117 = por %p115, %p116
      %p118 = scmp.ne.s32.totalorder %s104, %s105
      %p119 = scmp.eq.s32.totalorder %s33, 5
      %p120 = por %p118, %p119
      %p122 = scmp.ne.s32.totalorder %s105, %s121
      %p123 = scmp.eq.s32.totalorder %s33, 0
      %p124 = por %p122, %p123
      %s125 = ssub.s32 %s35, %s42
      %p126 = scmp.eq.s32.totalorder %s125, 0
      %s128 = sadd.s32 %s127, 1
      %s129 = scalar_select %p126, %s127, %s128
      %p132 = pneg %p126
      %p133 = scmp.eq.s32.totalorder %s27, 5
      %p134 = por %p132, %p133
      %p135 = scmp.ne.s32.totalorder %s127, %s130
      %p136 = scmp.eq.s32.totalorder %s27, 0
      %p137 = por %p135, %p136
      %p138 = scmp.ne.s32.totalorder %s127, %s130
      %p139 = scmp.eq.s32.totalorder %s32, 5
      %p140 = por %p138, %p139
      %p141 = scmp.ne.s32.totalorder %s130, %s131
      %p142 = scmp.eq.s32.totalorder %s32, 0
      %p143 = por %p141, %p142
      %p144 = scmp.ne.s32.totalorder %s130, %s131
      %p145 = scmp.eq.s32.totalorder %s33, 5
      %p146 = por %p144, %p145
      %p148 = scmp.ne.s32.totalorder %s131, %s147
      %p149 = scmp.eq.s32.totalorder %s33, 0
      %p150 = por %p148, %p149
      %s151 = ssub.s32 %s35, %s42
      %p152 = scmp.eq.s32.totalorder %s151, 0
      %s154 = sadd.s32 %s153, 1
      %s155 = scalar_select %p152, %s153, %s154
      %p158 = pneg %p152
      %p159 = scmp.eq.s32.totalorder %s27, 5
      %p160 = por %p158, %p159
      %p161 = scmp.ne.s32.totalorder %s153, %s156
      %p162 = scmp.eq.s32.totalorder %s27, 0
      %p163 = por %p161, %p162
      %p164 = scmp.ne.s32.totalorder %s153, %s156
      %p165 = scmp.eq.s32.totalorder %s32, 5
      %p166 = por %p164, %p165
      %p167 = scmp.ne.s32.totalorder %s156, %s157
      %p168 = scmp.eq.s32.totalorder %s32, 0
      %p169 = por %p167, %p168
      %p170 = scmp.ne.s32.totalorder %s156, %s157
      %p171 = scmp.eq.s32.totalorder %s33, 5
      %p172 = por %p170, %p171
      %p174 = scmp.ne.s32.totalorder %s157, %s173
      %p175 = scmp.eq.s32.totalorder %s33, 0
      %p176 = por %p174, %p175
      %s177 = ssub.s32 %s35, %s42
      %p178 = scmp.eq.s32.totalorder %s177, 0
      %s180 = sadd.s32 %s179, 1
      %s181 = scalar_select %p178, %s179, %s180
      %p184 = pneg %p178
      %p185 = scmp.eq.s32.totalorder %s27, 5
      %p186 = por %p184, %p185
      %p187 = scmp.ne.s32.totalorder %s179, %s182
      %p188 = scmp.eq.s32.totalorder %s27, 0
      %p189 = por %p187, %p188
      %p190 = scmp.ne.s32.totalorder %s179, %s182
      %p191 = scmp.eq.s32.totalorder %s32, 5
      %p192 = por %p190, %p191
      %p193 = scmp.ne.s32.totalorder %s182, %s183
      %p194 = scmp.eq.s32.totalorder %s32, 0
      %p195 = por %p193, %p194
      %p196 = scmp.ne.s32.totalorder %s182, %s183
      %p197 = scmp.eq.s32.totalorder %s33, 5
      %p198 = por %p196, %p197
      %p200 = scmp.ne.s32.totalorder %s183, %s199
      %p201 = scmp.eq.s32.totalorder %s33, 0
      %p202 = por %p200, %p201
      %s203 = ssub.s32 %s35, %s42
      %p204 = scmp.eq.s32.totalorder %s203, 0
      %s206 = sadd.s32 %s205, 1
      %s207 = scalar_select %p204, %s205, %s206
      %p210 = pneg %p204
      %p211 = scmp.eq.s32.totalorder %s27, 5
      %p212 = por %p210, %p211
      %p213 = scmp.ne.s32.totalorder %s205, %s208
      %p214 = scmp.eq.s32.totalorder %s27, 0
      %p215 = por %p213, %p214
      %p216 = scmp.ne.s32.totalorder %s205, %s208
      %p217 = scmp.eq.s32.totalorder %s32, 5
      %p218 = por %p216, %p217
      %p219 = scmp.ne.s32.totalorder %s208, %s209
      %p220 = scmp.eq.s32.totalorder %s32, 0
      %p221 = por %p219, %p220
      %p222 = scmp.ne.s32.totalorder %s208, %s209
      %p223 = scmp.eq.s32.totalorder %s33, 5
      %p224 = por %p222, %p223
      %p226 = scmp.ne.s32.totalorder %s209, %s225
      %p227 = scmp.eq.s32.totalorder %s33, 0
      %p228 = por %p226, %p227
      %s229 = ssub.s32 %s35, %s42
      %p230 = scmp.eq.s32.totalorder %s229, 0
      %s232 = sadd.s32 %s231, 1
      %s233 = scalar_select %p230, %s231, %s232
      %p236 = pneg %p230
      %p237 = scmp.eq.s32.totalorder %s27, 5
      %p238 = por %p236, %p237
      %p239 = scmp.ne.s32.totalorder %s231, %s234
      %p240 = scmp.eq.s32.totalorder %s27, 0
      %p241 = por %p239, %p240
      %p242 = scmp.ne.s32.totalorder %s231, %s234
      %p243 = scmp.eq.s32.totalorder %s32, 5
      %p244 = por %p242, %p243
      %p245 = scmp.ne.s32.totalorder %s234, %s235
      %p246 = scmp.eq.s32.totalorder %s32, 0
      %p247 = por %p245, %p246
      %p248 = scmp.ne.s32.totalorder %s234, %s235
      %p249 = scmp.eq.s32.totalorder %s33, 5
      %p250 = por %p248, %p249
      %p252 = scmp.ne.s32.totalorder %s235, %s251
      %p253 = scmp.eq.s32.totalorder %s33, 0
      %p254 = por %p252, %p253
      %s255 = ssub.s32 %s35, %s42
      %p256 = scmp.eq.s32.totalorder %s255, 0
      %s258 = sadd.s32 %s257, 1
      %s259 = scalar_select %p256, %s257, %s258
      %p262 = pneg %p256
      %p263 = scmp.eq.s32.totalorder %s27, 5
      %p264 = por %p262, %p263
      %p265 = scmp.ne.s32.totalorder %s257, %s260
      %p266 = scmp.eq.s32.totalorder %s27, 0
      %p267 = por %p265, %p266
      %p268 = scmp.ne.s32.totalorder %s257, %s260
      %p269 = scmp.eq.s32.totalorder %s32, 5
      %p270 = por %p268, %p269
      %p271 = scmp.ne.s32.totalorder %s260, %s261
      %p272 = scmp.eq.s32.totalorder %s32, 0
      %p273 = por %p271, %p272
      %p274 = scmp.ne.s32.totalorder %s260, %s261
      %p275 = scmp.eq.s32.totalorder %s33, 5
      %p276 = por %p274, %p275
      %p278 = scmp.ne.s32.totalorder %s261, %s277
      %p279 = scmp.eq.s32.totalorder %s33, 0
      %p280 = por %p278, %p279
      %s281 = ssub.s32 %s35, %s42
      %p282 = scmp.eq.s32.totalorder %s281, 0
      %s284 = sadd.s32 %s283, 1
      %s285 = scalar_select %p282, %s283, %s284
      %p288 = pneg %p282
      %p289 = scmp.eq.s32.totalorder %s27, 5
      %p290 = por %p288, %p289
      %p291 = scmp.ne.s32.totalorder %s283, %s286
      %p292 = scmp.eq.s32.totalorder %s27, 0
      %p293 = por %p291, %p292
      %p294 = scmp.ne.s32.totalorder %s283, %s286
      %p295 = scmp.eq.s32.totalorder %s32, 5
      %p296 = por %p294, %p295
      %p297 = scmp.ne.s32.totalorder %s286, %s287
      %p298 = scmp.eq.s32.totalorder %s32, 0
      %p299 = por %p297, %p298
      %p300 = scmp.ne.s32.totalorder %s286, %s287
      %p301 = scmp.eq.s32.totalorder %s33, 5
      %p302 = por %p300, %p301
      %p304 = scmp.ne.s32.totalorder %s287, %s303
      %p305 = scmp.eq.s32.totalorder %s33, 0
      %p306 = por %p304, %p305
      %s307 = ssub.s32 %s35, %s42
      %p308 = scmp.eq.s32.totalorder %s307, 0
      %s310 = sadd.s32 %s309, 1
      %s311 = scalar_select %p308, %s309, %s310
      %p314 = pneg %p308
      %p315 = scmp.eq.s32.totalorder %s27, 5
      %p316 = por %p314, %p315
      %p317 = scmp.ne.s32.totalorder %s309, %s312
      %p318 = scmp.eq.s32.totalorder %s27, 0
      %p319 = por %p317, %p318
      %p320 = scmp.ne.s32.totalorder %s309, %s312
      %p321 = scmp.eq.s32.totalorder %s32, 5
      %p322 = por %p320, %p321
      %p323 = scmp.ne.s32.totalorder %s312, %s313
      %p324 = scmp.eq.s32.totalorder %s32, 0
      %p325 = por %p323, %p324
      %p326 = scmp.ne.s32.totalorder %s312, %s313
      %p327 = scmp.eq.s32.totalorder %s33, 5
      %p328 = por %p326, %p327
      %p330 = scmp.ne.s32.totalorder %s313, %s329
      %p331 = scmp.eq.s32.totalorder %s33, 0
      %p332 = por %p330, %p331
      %s333 = ssub.s32 %s35, %s42
      %p334 = scmp.eq.s32.totalorder %s333, 0
      %s336 = sadd.s32 %s335, 1
      %s337 = scalar_select %p334, %s335, %s336
      %p340 = pneg %p334
      %p341 = scmp.eq.s32.totalorder %s27, 5
      %p342 = por %p340, %p341
      %p343 = scmp.ne.s32.totalorder %s335, %s338
      %p344 = scmp.eq.s32.totalorder %s27, 0
      %p345 = por %p343, %p344
      %p346 = scmp.ne.s32.totalorder %s335, %s338
      %p347 = scmp.eq.s32.totalorder %s32, 5
      %p348 = por %p346, %p347
      %p349 = scmp.ne.s32.totalorder %s338, %s339
      %p350 = scmp.eq.s32.totalorder %s32, 0
      %p351 = por %p349, %p350
      %p352 = scmp.ne.s32.totalorder %s338, %s339
      %p353 = scmp.eq.s32.totalorder %s33, 5
      %p354 = por %p352, %p353
      %p356 = scmp.ne.s32.totalorder %s339, %s355
      %p357 = scmp.eq.s32.totalorder %s33, 0
      %p358 = por %p356, %p357
      %s359 = ssub.s32 %s35, %s42
      %p360 = scmp.eq.s32.totalorder %s359, 0
      %s362 = sadd.s32 %s361, 1
      %s363 = scalar_select %p360, %s361, %s362
      %p366 = pneg %p360
      %p367 = scmp.eq.s32.totalorder %s27, 5
      %p368 = por %p366, %p367
      %p369 = scmp.ne.s32.totalorder %s361, %s364
      %p370 = scmp.eq.s32.totalorder %s27, 0
      %p371 = por %p369, %p370
      %p372 = scmp.ne.s32.totalorder %s361, %s364
      %p373 = scmp.eq.s32.totalorder %s32, 5
      %p374 = por %p372, %p373
      %p375 = scmp.ne.s32.totalorder %s364, %s365
      %p376 = scmp.eq.s32.totalorder %s32, 0
      %p377 = por %p375, %p376
      %p378 = scmp.ne.s32.totalorder %s364, %s365
      %p379 = scmp.eq.s32.totalorder %s33, 5
      %p380 = por %p378, %p379
      %p382 = scmp.ne.s32.totalorder %s365, %s381
      %p383 = scmp.eq.s32.totalorder %s33, 0
      %p384 = por %p382, %p383
      %s386 = sadd.s32 %s385, 1
      %p389 = scmp.eq.s32.totalorder %s27, 5
      %p390 = scmp.ne.s32.totalorder %s385, %s387
      %p391 = scmp.eq.s32.totalorder %s27, 0
      %p392 = por %p390, %p391
      %p393 = scmp.ne.s32.totalorder %s385, %s387
      %p394 = scmp.eq.s32.totalorder %s32, 5
      %p395 = por %p393, %p394
      %p396 = scmp.ne.s32.totalorder %s387, %s388
      %p397 = scmp.eq.s32.totalorder %s32, 0
      %p398 = por %p396, %p397
      %p399 = scmp.ne.s32.totalorder %s387, %s388
      %p400 = scmp.eq.s32.totalorder %s33, 5
      %p401 = por %p399, %p400
      %p403 = scmp.ne.s32.totalorder %s388, %s402
      %p404 = scmp.eq.s32.totalorder %s33, 0
      %p405 = por %p403, %p404
      %s407 = sadd.s32 %s406, 1
      %p410 = scmp.eq.s32.totalorder %s27, 5
      %p411 = scmp.ne.s32.totalorder %s406, %s408
      %p412 = scmp.eq.s32.totalorder %s27, 0
      %p413 = por %p411, %p412
      %p414 = scmp.ne.s32.totalorder %s406, %s408
      %p415 = scmp.eq.s32.totalorder %s32, 5
      %p416 = por %p414, %p415
      %p417 = scmp.ne.s32.totalorder %s408, %s409
      %p418 = scmp.eq.s32.totalorder %s32, 0
      %p419 = por %p417, %p418
      %p420 = scmp.ne.s32.totalorder %s408, %s409
      %p421 = scmp.eq.s32.totalorder %s33, 5
      %p422 = por %p420, %p421
      %p424 = scmp.ne.s32.totalorder %s409, %s423
      %p425 = scmp.eq.s32.totalorder %s33, 0
      %p426 = por %p424, %p425
      %s427 = ssub.s32 %s34, %s46
      %p428 = scmp.eq.s32.totalorder %s427, 0
      %s430 = sadd.s32 %s429, 1
      %s431 = scalar_select %p428, %s429, %s430
      %p434 = pneg %p428
      %p435 = scmp.eq.s32.totalorder %s27, 5
      %p436 = por %p434, %p435
      %p437 = scmp.ne.s32.totalorder %s429, %s432
      %p438 = scmp.eq.s32.totalorder %s27, 0
      %p439 = por %p437, %p438
      %p440 = scmp.ne.s32.totalorder %s429, %s432
      %p441 = scmp.eq.s32.totalorder %s32, 5
      %p442 = por %p440, %p441
      %p443 = scmp.ne.s32.totalorder %s432, %s433
      %p444 = scmp.eq.s32.totalorder %s32, 0
      %p445 = por %p443, %p444
      %p446 = scmp.ne.s32.totalorder %s432, %s433
      %p447 = scmp.eq.s32.totalorder %s33, 5
      %p448 = por %p446, %p447
      %p450 = scmp.ne.s32.totalorder %s433, %s449
      %p451 = scmp.eq.s32.totalorder %s33, 0
      %p452 = por %p450, %p451
      %p453 = scmp.le.s32.totalorder 1, %s27
      %p454 = scmp.lt.s32.totalorder %s27, 7
      %p455 = pnand %p453, %p454
      %p456 = pneg %p455
      // Predicated region
      $region9: #{clip_forward.1} parent=5 // pred_check
        _
      $region10: #{clip_forward.1} parent=5 // pred_check_branch
        %458 = sbr.rel (%p455) target = $region12
      $region11: #{clip_forward.1} parent=5 // pred_region
        %s459 = ssub.s32 %s27, 1
        // Predicated region
        $region13: #{clip_forward.1} parent=11 // pred_check
          %p460 = pneg %p398
        $region14: #{clip_forward.1} parent=11 // pred_check_branch
          %462 = sbr.rel (%p460) target = $region16
        $region15: #{clip_forward.1} parent=11 // pred_region
          _
        $region16: #{clip_forward.1} parent=11 // pred_fallthru
          _
        // Predicated region
        $region17: #{clip_forward.1} parent=11 // pred_check
          %p463 = pneg %p419
        $region18: #{clip_forward.1} parent=11 // pred_check_branch
          %465 = sbr.rel (%p463) target = $region20
        $region19: #{clip_forward.1} parent=11 // pred_region
          _
        $region20: #{clip_forward.1} parent=11 // pred_fallthru
          _
      $region12: #{clip_forward.1} parent=5 // pred_fallthru
        _
      %p466 = scmp.lt.s32.totalorder %s27, 6
      // Predicated region
      $region21: #{clip_forward.1} parent=5 // pred_check
        %p467 = pneg %p466
      $region22: #{clip_forward.1} parent=5 // pred_check_branch
        %469 = sbr.rel (%p467) target = $region24
      $region23: #{clip_forward.1} parent=5 // pred_region
        // Predicated region
        $region25: #{clip_forward.1} parent=23 // pred_check
          %p470 = pneg %p59
        $region26: #{clip_forward.1} parent=23 // pred_check_branch
          %472 = sbr.rel (%p470) target = $region28
        $region27: #{clip_forward.1} parent=23 // pred_region
          %p473 = scmp.lt.s32.totalorder %s34, 1
          %s474 = scalar_select %p473, %s34, 1
          %s475 = smul.addr %s474, 2
          %s476 = smul.addr %s475, 8
          %s477 = scalar_lea.vmem %s0, %s476
        $region28: #{clip_forward.1} parent=23 // pred_fallthru
          _
        // Predicated region
        $region29: #{clip_forward.1} parent=23 // pred_check
          %p478 = pneg %p85
        $region30: #{clip_forward.1} parent=23 // pred_check_branch
          %480 = sbr.rel (%p478) target = $region32
        $region31: #{clip_forward.1} parent=23 // pred_region
          %p481 = scmp.lt.s32.totalorder %s35, 2
          %s482 = scalar_select %p481, %s35, 2
          %s483 = scalar_lea.vmem %s1, %s482
        $region32: #{clip_forward.1} parent=23 // pred_fallthru
          _
        // Predicated region
        $region33: #{clip_forward.1} parent=23 // pred_check
          %p484 = pneg %p111
        $region34: #{clip_forward.1} parent=23 // pred_check_branch
          %486 = sbr.rel (%p484) target = $region36
        $region35: #{clip_forward.1} parent=23 // pred_region
          %p487 = scmp.lt.s32.totalorder %s35, 2
          %s488 = scalar_select %p487, %s35, 2
          %s489 = scalar_lea.vmem %s2, %s488
        $region36: #{clip_forward.1} parent=23 // pred_fallthru
          _
        // Predicated region
        $region37: #{clip_forward.1} parent=23 // pred_check
          %p490 = pneg %p137
        $region38: #{clip_forward.1} parent=23 // pred_check_branch
          %492 = sbr.rel (%p490) target = $region40
        $region39: #{clip_forward.1} parent=23 // pred_region
          %s493 = sand.u32 %s127, 1
          %s494 = scalar_lea.sflag [#allocation3], %s493
          %s495 = sand.u32 %s127, 1
          %s496 = smul.addr %s495, 192
          %s497 = scalar_lea.vmem [#allocation2], %s496
          %499 = vsyncadd %s494, 0
          %s500 = smul.addr %s35, 48
          %s501 = smul.addr %s500, 4
          %s502 = scalar_lea.hbm %s3, %s501
          %s503 = sshll.u32 %s502, 4
          %s504 = int_to_ptr.hbm [resolvable:$true] %s503
          %s505 = sshll.u32 %s497, 4
          %s506 = int_to_ptr.vmem [resolvable:$true] %s505
          %511 = dma.hbm_to_vmem [thread:$0]  %s504, 3072, %s506, %s494, 192, 192, 12
        $region40: #{clip_forward.1} parent=23 // pred_fallthru
          _
        // Predicated region
        $region41: #{clip_forward.1} parent=23 // pred_check
          %p512 = pneg %p163
        $region42: #{clip_forward.1} parent=23 // pred_check_branch
          %514 = sbr.rel (%p512) target = $region44
        $region43: #{clip_forward.1} parent=23 // pred_region
          %p515 = scmp.lt.s32.totalorder %s35, 2
          %s516 = scalar_select %p515, %s35, 2
          %s517 = smul.addr %s516, 3
          %s518 = scalar_lea.vmem %s4, %s517
        $region44: #{clip_forward.1} parent=23 // pred_fallthru
          _
        // Predicated region
        $region45: #{clip_forward.1} parent=23 // pred_check
          %p519 = pneg %p189
        $region46: #{clip_forward.1} parent=23 // pred_check_branch
          %521 = sbr.rel (%p519) target = $region48
        $region47: #{clip_forward.1} parent=23 // pred_region
          %p522 = scmp.lt.s32.totalorder %s35, 2
          %s523 = scalar_select %p522, %s35, 2
          %s524 = smul.addr %s523, 16
          %s525 = smul.addr %s524, 4
          %s526 = scalar_lea.vmem %s5, %s525
        $region48: #{clip_forward.1} parent=23 // pred_fallthru
          _
        // Predicated region
        $region49: #{clip_forward.1} parent=23 // pred_check
          %p527 = pneg %p215
        $region50: #{clip_forward.1} parent=23 // pred_check_branch
          %529 = sbr.rel (%p527) target = $region52
        $region51: #{clip_forward.1} parent=23 // pred_region
          %p530 = scmp.lt.s32.totalorder %s35, 2
          %s531 = scalar_select %p530, %s35, 2
          %s532 = scalar_lea.vmem %s6, %s531
        $region52: #{clip_forward.1} parent=23 // pred_fallthru
          _
        // Predicated region
        $region53: #{clip_forward.1} parent=23 // pred_check
          %p533 = pneg %p241
        $region54: #{clip_forward.1} parent=23 // pred_check_branch
          %535 = sbr.rel (%p533) target = $region56
        $region55: #{clip_forward.1} parent=23 // pred_region
          %p536 = scmp.lt.s32.totalorder %s35, 2
          %s537 = scalar_select %p536, %s35, 2
          %s538 = scalar_lea.vmem %s7, %s537
        $region56: #{clip_forward.1} parent=23 // pred_fallthru
          _
        // Predicated region
        $region57: #{clip_forward.1} parent=23 // pred_check
          %p539 = pneg %p267
        $region58: #{clip_forward.1} parent=23 // pred_check_branch
          %541 = sbr.rel (%p539) target = $region60
        $region59: #{clip_forward.1} parent=23 // pred_region
          %p542 = scmp.lt.s32.totalorder %s35, 2
          %s543 = scalar_select %p542, %s35, 2
          %s544 = scalar_lea.vmem %s8, %s543
        $region60: #{clip_forward.1} parent=23 // pred_fallthru
          _
        // Predicated region
        $region61: #{clip_forward.1} parent=23 // pred_check
          %p545 = pneg %p293
        $region62: #{clip_forward.1} parent=23 // pred_check_branch
          %547 = sbr.rel (%p545) target = $region64
        $region63: #{clip_forward.1} parent=23 // pred_region
          %s548 = sand.u32 %s27, 1
          %s549 = scalar_lea.sflag [#allocation5], %s548
          %s550 = sand.u32 %s283, 1
          %s551 = smul.addr %s550, 256
          %s552 = scalar_lea.vmem [#allocation4], %s551
          %554 = vsyncadd %s549, 0
          %s555 = smul.addr %s35, 64
          %s556 = smul.addr %s555, 4
          %s557 = scalar_lea.hbm %s9, %s556
          %s558 = sshll.u32 %s557, 4
          %s559 = int_to_ptr.hbm [resolvable:$true] %s558
          %s560 = sshll.u32 %s552, 4
          %s561 = int_to_ptr.vmem [resolvable:$true] %s560
          %566 = dma.hbm_to_vmem [thread:$0]  %s559, 4096, %s561, %s549, 256, 256, 16
        $region64: #{clip_forward.1} parent=23 // pred_fallthru
          _
        // Predicated region
        $region65: #{clip_forward.1} parent=23 // pred_check
          %p567 = pneg %p319
        $region66: #{clip_forward.1} parent=23 // pred_check_branch
          %569 = sbr.rel (%p567) target = $region68
        $region67: #{clip_forward.1} parent=23 // pred_region
          %p570 = scmp.lt.s32.totalorder %s35, 2
          %s571 = scalar_select %p570, %s35, 2
          %s572 = smul.addr %s571, 4
          %s573 = scalar_lea.vmem %s10, %s572
        $region68: #{clip_forward.1} parent=23 // pred_fallthru
          _
        // Predicated region
        $region69: #{clip_forward.1} parent=23 // pred_check
          %p574 = pneg %p345
        $region70: #{clip_forward.1} parent=23 // pred_check_branch
          %576 = sbr.rel (%p574) target = $region72
        $region71: #{clip_forward.1} parent=23 // pred_region
          %s577 = sand.u32 %s27, 1
          %s578 = scalar_lea.sflag [#allocation5], %s577
          %s579 = sand.u32 %s335, 1
          %s580 = smul.addr %s579, 256
          %s581 = scalar_lea.vmem [#allocation6], %s580
          %583 = vsyncadd %s578, 0
          %s584 = smul.addr %s35, 64
          %s585 = smul.addr %s584, 4
          %s586 = scalar_lea.hbm %s11, %s585
          %s587 = sshll.u32 %s586, 4
          %s588 = int_to_ptr.hbm [resolvable:$true] %s587
          %s589 = sshll.u32 %s581, 4
          %s590 = int_to_ptr.vmem [resolvable:$true] %s589
          %595 = dma.hbm_to_vmem [thread:$0]  %s588, 4096, %s590, %s578, 64, 64, 4
        $region72: #{clip_forward.1} parent=23 // pred_fallthru
          _
        // Predicated region
        $region73: #{clip_forward.1} parent=23 // pred_check
          %p596 = pneg %p371
        $region74: #{clip_forward.1} parent=23 // pred_check_branch
          %598 = sbr.rel (%p596) target = $region76
        $region75: #{clip_forward.1} parent=23 // pred_region
          %p599 = scmp.lt.s32.totalorder %s35, 2
          %s600 = scalar_select %p599, %s35, 2
          %s601 = scalar_lea.vmem %s12, %s600
        $region76: #{clip_forward.1} parent=23 // pred_fallthru
          _
      $region24: #{clip_forward.1} parent=5 // pred_fallthru
        _
      %p602 = scmp.le.s32.totalorder 1, %s27
      %p603 = scmp.lt.s32.totalorder %s27, 7
      %p604 = pnand %p602, %p603
      %p605 = pneg %p604
      // Predicated region
      $region77: #{clip_forward.1} parent=5 // pred_check
        _
      $region78: #{clip_forward.1} parent=5 // pred_check_branch
        %607 = sbr.rel (%p604) target = $region80
      $region79: #{clip_forward.1} parent=5 // pred_region
        %s608 = ssub.s32 %s27, 1
        %s609 = sand.u32 %s130, 1
        %s610 = scalar_lea.sflag [#allocation3], %s609
        %s611 = sand.u32 %s130, 1
        %s612 = smul.addr %s611, 192
        %s613 = scalar_lea.vmem [#allocation2], %s612
        // Predicated region
        $region81: #{clip_forward.1} parent=79 // pred_check
          %p614 = pneg %p143
        $region82: #{clip_forward.1} parent=79 // pred_check_branch
          %616 = sbr.rel (%p614) target = $region84
        $region83: #{clip_forward.1} parent=79 // pred_region
          %618 = dma.done %s610, 3072
        $region84: #{clip_forward.1} parent=79 // pred_fallthru
          _
        %s619 = sand.u32 %s32, 1
        %s620 = scalar_lea.sflag [#allocation5], %s619
        %s621 = sand.u32 %s286, 1
        %s622 = smul.addr %s621, 256
        %s623 = scalar_lea.vmem [#allocation4], %s622
        // Predicated region
        $region85: #{clip_forward.1} parent=79 // pred_check
          %p624 = pneg %p299
        $region86: #{clip_forward.1} parent=79 // pred_check_branch
          %626 = sbr.rel (%p624) target = $region88
        $region87: #{clip_forward.1} parent=79 // pred_region
          %628 = dma.done %s620, 4096
        $region88: #{clip_forward.1} parent=79 // pred_fallthru
          _
        %s629 = sand.u32 %s32, 1
        %s630 = scalar_lea.sflag [#allocation5], %s629
        %s631 = sand.u32 %s338, 1
        %s632 = smul.addr %s631, 256
        %s633 = scalar_lea.vmem [#allocation6], %s632
        // Predicated region
        $region89: #{clip_forward.1} parent=79 // pred_check
          %p634 = pneg %p351
        $region90: #{clip_forward.1} parent=79 // pred_check_branch
          %636 = sbr.rel (%p634) target = $region92
        $region91: #{clip_forward.1} parent=79 // pred_region
          %638 = dma.done %s630, 4096
        $region92: #{clip_forward.1} parent=79 // pred_fallthru
          _
        %p639 = scmp.lt.s32.totalorder %s36, 1
        %s640 = scalar_select %p639, %s36, 1
        %s641 = smul.addr %s640, 2
        %s642 = smul.addr %s641, 8
        %s643 = scalar_lea.vmem %s0, %s642
        %p644 = pneg %p65
        %p645 = pneg %p62
        %p646 = scmp.lt.s32.totalorder %s37, 2
        %s647 = scalar_select %p646, %s37, 2
        %s648 = scalar_lea.vmem %s1, %s647
        %p649 = pneg %p91
        %p650 = pneg %p88
        %p651 = scmp.lt.s32.totalorder %s37, 2
        %s652 = scalar_select %p651, %s37, 2
        %s653 = scalar_lea.vmem %s2, %s652
        %p654 = pneg %p117
        %p655 = pneg %p114
        %s656 = sand.u32 %s130, 1
        %s657 = scalar_lea.sflag [#allocation3], %s656
        %s658 = sand.u32 %s130, 1
        %s659 = smul.addr %s658, 192
        %s660 = scalar_lea.vmem [#allocation2], %s659
        %p661 = pneg %p143
        %p662 = pneg %p140
        %p663 = scmp.lt.s32.totalorder %s37, 2
        %s664 = scalar_select %p663, %s37, 2
        %s665 = smul.addr %s664, 3
        %s666 = scalar_lea.vmem %s4, %s665
        %p667 = pneg %p169
        %p668 = pneg %p166
        %p669 = scmp.lt.s32.totalorder %s37, 2
        %s670 = scalar_select %p669, %s37, 2
        %s671 = smul.addr %s670, 16
        %s672 = smul.addr %s671, 4
        %s673 = scalar_lea.vmem %s5, %s672
        %p674 = pneg %p195
        %p675 = pneg %p192
        %p676 = scmp.lt.s32.totalorder %s37, 2
        %s677 = scalar_select %p676, %s37, 2
        %s678 = scalar_lea.vmem %s6, %s677
        %p679 = pneg %p221
        %p680 = pneg %p218
        %p681 = scmp.lt.s32.totalorder %s37, 2
        %s682 = scalar_select %p681, %s37, 2
        %s683 = scalar_lea.vmem %s7, %s682
        %p684 = pneg %p247
        %p685 = pneg %p244
        %p686 = scmp.lt.s32.totalorder %s37, 2
        %s687 = scalar_select %p686, %s37, 2
        %s688 = scalar_lea.vmem %s8, %s687
        %p689 = pneg %p273
        %p690 = pneg %p270
        %s691 = sand.u32 %s32, 1
        %s692 = scalar_lea.sflag [#allocation5], %s691
        %s693 = sand.u32 %s286, 1
        %s694 = smul.addr %s693, 256
        %s695 = scalar_lea.vmem [#allocation4], %s694
        %p696 = pneg %p299
        %p697 = pneg %p296
        %p698 = scmp.lt.s32.totalorder %s37, 2
        %s699 = scalar_select %p698, %s37, 2
        %s700 = smul.addr %s699, 4
        %s701 = scalar_lea.vmem %s10, %s700
        %p702 = pneg %p325
        %p703 = pneg %p322
        %s704 = sand.u32 %s32, 1
        %s705 = scalar_lea.sflag [#allocation5], %s704
        %s706 = sand.u32 %s338, 1
        %s707 = smul.addr %s706, 256
        %s708 = scalar_lea.vmem [#allocation6], %s707
        %p709 = pneg %p351
        %p710 = pneg %p348
        %p711 = scmp.lt.s32.totalorder %s37, 2
        %s712 = scalar_select %p711, %s37, 2
        %s713 = scalar_lea.vmem %s12, %s712
        %p714 = pneg %p377
        %p715 = pneg %p374
        %p716 = pneg %p398
        %p717 = pneg %p395
        %p718 = pneg %p419
        %p719 = pneg %p416
        %p720 = pneg %p445
        %p721 = pneg %p442
        %p722 = scmp.lt.s32.totalorder %s36, 1
        %s723 = scalar_select %p722, %s36, 1
        %s724 = smul.addr %s723, 2
        %s725 = smul.addr %s724, 8
        %s726 = scalar_lea.vmem %s15, %s725
        %p727 = scmp.lt.s32.totalorder %s36, 1
        %s728 = scalar_select %p727, %s36, 1
        %s729 = smul.addr %s728, 2
        %s730 = smul.addr %s729, 8
        %s731 = scalar_lea.vmem %s0, %s730
        %p732 = scmp.lt.s32.totalorder %s37, 2
        %s733 = scalar_select %p732, %s37, 2
        %s734 = scalar_lea.vmem %s1, %s733
        %p735 = scmp.lt.s32.totalorder %s37, 2
        %s736 = scalar_select %p735, %s37, 2
        %s737 = scalar_lea.vmem %s2, %s736
        %p738 = scmp.lt.s32.totalorder %s37, 2
        %s739 = scalar_select %p738, %s37, 2
        %s740 = smul.addr %s739, 3
        %s741 = scalar_lea.vmem %s4, %s740
        %p742 = scmp.lt.s32.totalorder %s37, 2
        %s743 = scalar_select %p742, %s37, 2
        %s744 = smul.addr %s743, 16
        %s745 = smul.addr %s744, 4
        %s746 = scalar_lea.vmem %s5, %s745
        %p747 = scmp.lt.s32.totalorder %s37, 2
        %s748 = scalar_select %p747, %s37, 2
        %s749 = scalar_lea.vmem %s6, %s748
        %p750 = scmp.lt.s32.totalorder %s37, 2
        %s751 = scalar_select %p750, %s37, 2
        %s752 = scalar_lea.vmem %s7, %s751
        %p753 = scmp.lt.s32.totalorder %s37, 2
        %s754 = scalar_select %p753, %s37, 2
        %s755 = scalar_lea.vmem %s8, %s754
        %p756 = scmp.lt.s32.totalorder %s37, 2
        %s757 = scalar_select %p756, %s37, 2
        %s758 = smul.addr %s757, 4
        %s759 = scalar_lea.vmem %s10, %s758
        %p760 = scmp.lt.s32.totalorder %s37, 2
        %s761 = scalar_select %p760, %s37, 2
        %s762 = scalar_lea.vmem %s12, %s761
        %p763 = scmp.lt.s32.totalorder %s36, 1
        %s764 = scalar_select %p763, %s36, 1
        %s765 = smul.addr %s764, 2
        %s766 = smul.addr %s765, 8
        %s767 = scalar_lea.vmem %s15, %s766
        %p769 = scmp.eq.s32.totalorder %s37, 0
        // Predicated region
        $region93: #{clip_forward.1} parent=79 // pred_check
          %p770 = pneg %p769
        $region94: #{clip_forward.1} parent=79 // pred_check_branch
          %772 = sbr.rel (%p770) target = $region96
        $region95: #{clip_forward.1} parent=79 // pred_region
          %v773 = vld [vmem:[%s731] sm:$0xff]
          %v774 = vld [vmem:[%s731 + $0x8] sm:$0xff]
          %775 = vst [vmem:[%s767] sm:$0xff] %v773
          %776 = vst [vmem:[%s767 + $0x8] sm:$0xff] %v774
        $region96: #{clip_forward.1} parent=79 // pred_fallthru
          _
        %v777 = vld [vmem:[%s767] sm:$0xff]
        %v778 = vld [vmem:[%s767 + $0x8] sm:$0xff]
        %v779 = vld [vmem:[%s734] sm:$0x1]
        %v780 = vld [vmem:[%s737] sm:$0x1]
        %781 = vadd.xlane.f32.xlu0 %v777
        %v782 = vpop.xlane.xlu0 %781
        %783 = vadd.xlane.f32.xlu0 %v778
        %v784 = vpop.xlane.xlu0 %783
        %v785 = vrcp.pop 128.0
        %v786 = vmul.f32 128.0, %v785
        %v787 = vsub.f32 1.0, %v786
        %v788 = vmul.f32 %v785, %v787
        %v789 = vadd.f32 %v785, %v788
        %vm790 = vweird.f32 %v785
        %v791 = vsel %vm790, %v785, %v789
        %v792 = vmul.f32 %v782, %v791
        %v793 = vmul.f32 %v784, %v791
        %v794 = vsub.f32 %v777, %v792
        %v795 = vsub.f32 %v778, %v793
        %v796 = vmul.f32 %v794, %v794
        %v797 = vmul.f32 %v795, %v795
        %798 = vadd.xlane.f32.xlu0 %v796
        %v799 = vpop.xlane.xlu0 %798
        %800 = vadd.xlane.f32.xlu0 %v797
        %v801 = vpop.xlane.xlu0 %800
        %v802 = vmul.f32 %v799, %v791
        %v803 = vmul.f32 %v801, %v791
        %v804 = vadd.f32 %v802, 1e-05
        %v805 = vadd.f32 %v803, 1e-05
        %v806 = vrsqrt.pop %v804
        %v807 = vmul.f32 %v806, %v804
        %v808 = vmul.f32 %v807, %v806
        %v809 = vmul.f32 0.5, %v808
        %v810 = vsub.f32 1.5, %v809
        %v811 = vmul.f32 %v806, %v810
        %vm812 = vweird.f32 %v804
        %vm813 = vweird.f32 %v806
        %vm814 = vmor %vm812, %vm813
        %v815 = vsel %vm814, %v806, %v811
        %v816 = vrsqrt.pop %v805
        %v817 = vmul.f32 %v816, %v805
        %v818 = vmul.f32 %v817, %v816
        %v819 = vmul.f32 0.5, %v818
        %v820 = vsub.f32 1.5, %v819
        %v821 = vmul.f32 %v816, %v820
        %vm822 = vweird.f32 %v805
        %vm823 = vweird.f32 %v816
        %vm824 = vmor %vm822, %vm823
        %v825 = vsel %vm824, %v816, %v821
        %v826 = vmul.f32 %v794, %v815
        %v827 = vmul.f32 %v795, %v825
        %v829 = vperm.slane %v779, 0
        %v831 = vmul.f32 %v826, %v829
        %v832 = vmul.f32 %v827, %v829
        %v834 = vperm.slane %v780, 0
        %v836 = vadd.f32 %v831, %v834
        %v837 = vadd.f32 %v832, %v834
        %v838 = vpack.c.bf16 %v837, %v836
        %v839 = vld [vmem:[%s613] sm:$0xff]
        %v840 = vld [vmem:[%s613 + $0x8] sm:$0xf]
        %v841 = vld [vmem:[%s613 + $0xc] sm:$0xff]
        %v842 = vld [vmem:[%s613 + $0x14] sm:$0xf]
        %v843 = vld [vmem:[%s613 + $0x18] sm:$0xff]
        %v844 = vld [vmem:[%s613 + $0x20] sm:$0xf]
        %v845 = vld [vmem:[%s613 + $0x24] sm:$0xff]
        %v846 = vld [vmem:[%s613 + $0x2c] sm:$0xf]
        %v847 = vld [vmem:[%s613 + $0x30] sm:$0xff]
        %v848 = vld [vmem:[%s613 + $0x38] sm:$0xf]
        %v849 = vld [vmem:[%s613 + $0x3c] sm:$0xff]
        %v850 = vld [vmem:[%s613 + $0x44] sm:$0xf]
        %v851 = vld [vmem:[%s613 + $0x48] sm:$0xff]
        %v852 = vld [vmem:[%s613 + $0x50] sm:$0xf]
        %v853 = vld [vmem:[%s613 + $0x54] sm:$0xff]
        %v854 = vld [vmem:[%s613 + $0x5c] sm:$0xf]
        %v855 = vld [vmem:[%s613 + $0x60] sm:$0xff]
        %v856 = vld [vmem:[%s613 + $0x68] sm:$0xf]
        %v857 = vld [vmem:[%s613 + $0x6c] sm:$0xff]
        %v858 = vld [vmem:[%s613 + $0x74] sm:$0xf]
        %v859 = vld [vmem:[%s613 + $0x78] sm:$0xff]
        %v860 = vld [vmem:[%s613 + $0x80] sm:$0xf]
        %v861 = vld [vmem:[%s613 + $0x84] sm:$0xff]
        %v862 = vld [vmem:[%s613 + $0x8c] sm:$0xf]
        %v863 = vld [vmem:[%s613 + $0x90] sm:$0xff]
        %v864 = vld [vmem:[%s613 + $0x98] sm:$0xf]
        %v865 = vld [vmem:[%s613 + $0x9c] sm:$0xff]
        %v866 = vld [vmem:[%s613 + $0xa4] sm:$0xf]
        %v867 = vld [vmem:[%s613 + $0xa8] sm:$0xff]
        %v868 = vld [vmem:[%s613 + $0xb0] sm:$0xf]
        %v869 = vld [vmem:[%s613 + $0xb4] sm:$0xff]
        %v870 = vld [vmem:[%s613 + $0xbc] sm:$0xf]
        %v871 = vld [vmem:[%s741] sm:$0x7]
        %v873 = vperm.slane %v871, 0
        %v874 = vperm.slane %v871, 1
        %v875 = vperm.slane %v871, 2
        %v911 = vunpack.c.l.b16 %v839
        %v912 = vunpack.c.h.b16 %v839
        %v913 = vunpack.c.l.b16 %v840
        %v914 = vunpack.c.l.b16 %v841
        %v915 = vunpack.c.h.b16 %v841
        %v916 = vunpack.c.l.b16 %v842
        %v917 = vunpack.c.l.b16 %v843
        %v918 = vunpack.c.h.b16 %v843
        %v919 = vunpack.c.l.b16 %v844
        %v920 = vunpack.c.l.b16 %v845
        %v921 = vunpack.c.h.b16 %v845
        %v922 = vunpack.c.l.b16 %v846
        %v923 = vunpack.c.l.b16 %v847
        %v924 = vunpack.c.h.b16 %v847
        %v925 = vunpack.c.l.b16 %v848
        %v926 = vunpack.c.l.b16 %v849
        %v927 = vunpack.c.h.b16 %v849
        %v928 = vunpack.c.l.b16 %v850
        %v929 = vunpack.c.l.b16 %v851
        %v930 = vunpack.c.h.b16 %v851
        %v931 = vunpack.c.l.b16 %v852
        %v932 = vunpack.c.l.b16 %v853
        %v933 = vunpack.c.h.b16 %v853
        %v934 = vunpack.c.l.b16 %v854
        %v935 = vunpack.c.l.b16 %v855
        %v936 = vunpack.c.h.b16 %v855
        %v937 = vunpack.c.l.b16 %v856
        %v938 = vunpack.c.l.b16 %v857
        %v939 = vunpack.c.h.b16 %v857
        %v940 = vunpack.c.l.b16 %v858
        %v941 = vunpack.c.l.b16 %v859
        %v942 = vunpack.c.h.b16 %v859
        %v943 = vunpack.c.l.b16 %v860
        %v944 = vunpack.c.l.b16 %v861
        %v945 = vunpack.c.h.b16 %v861
        %v946 = vunpack.c.l.b16 %v862
        %v947 = vunpack.c.l.b16 %v863
        %v948 = vunpack.c.h.b16 %v863
        %v949 = vunpack.c.l.b16 %v864
        %v950 = vunpack.c.l.b16 %v865
        %v951 = vunpack.c.h.b16 %v865
        %v952 = vunpack.c.l.b16 %v866
        %v953 = vunpack.c.l.b16 %v867
        %v954 = vunpack.c.h.b16 %v867
        %v955 = vunpack.c.l.b16 %v868
        %v956 = vunpack.c.l.b16 %v869
        %v957 = vunpack.c.h.b16 %v869
        %v958 = vunpack.c.l.b16 %v870
        %v959 = vpack.c.b16 %v914, %v911
        %v960 = vpack.c.b16 %v915, %v912
        %v961 = vpack.c.b16 %v916, %v913
        %v962 = vpack.c.b16 %v920, %v917
        %v963 = vpack.c.b16 %v921, %v918
        %v964 = vpack.c.b16 %v922, %v919
        %v965 = vpack.c.b16 %v926, %v923
        %v966 = vpack.c.b16 %v927, %v924
        %v967 = vpack.c.b16 %v928, %v925
        %v968 = vpack.c.b16 %v932, %v929
        %v969 = vpack.c.b16 %v933, %v930
        %v970 = vpack.c.b16 %v934, %v931
        %v971 = vpack.c.b16 %v938, %v935
        %v972 = vpack.c.b16 %v939, %v936
        %v973 = vpack.c.b16 %v940, %v937
        %v974 = vpack.c.b16 %v944, %v941
        %v975 = vpack.c.b16 %v945, %v942
        %v976 = vpack.c.b16 %v946, %v943
        %v977 = vpack.c.b16 %v950, %v947
        %v978 = vpack.c.b16 %v951, %v948
        %v979 = vpack.c.b16 %v952, %v949
        %v980 = vpack.c.b16 %v956, %v953
        %v981 = vpack.c.b16 %v957, %v954
        %v982 = vpack.c.b16 %v958, %v955
        %1007 = vmatpush.bf16.msra.mxu0 %v980
        %1008 = vmatpush.bf16.msra.mxu0 %v977
        %1009 = vmatpush.bf16.msra.mxu0 %v974
        %1010 = vmatpush.bf16.msra.mxu0 %v971
        %1011 = vmatpush.bf16.msra.mxu0 %v968
        %1012 = vmatpush.bf16.msra.mxu0 %v965
        %1013 = vmatpush.bf16.msra.mxu0 %v962
        %1014 = vmatpush.bf16.msra.mxu0 %v959
        %1015 = vmatmul.bf16.gmra.mxu0 %v838
        %v1016 = vpop.f32.mrf.mxu0
        %v1017 = vadd.f32 %v873, %v1016
        %v1018 = vpop.f32.mrf.mxu0
        %v1019 = vadd.f32 %v873, %v1018
        %1020 = vdwg.mxu0
        %1021 = vmatpush.bf16.msra.mxu0 %v981
        %1022 = vmatpush.bf16.msra.mxu0 %v978
        %1023 = vmatpush.bf16.msra.mxu0 %v975
        %1024 = vmatpush.bf16.msra.mxu0 %v972
        %1025 = vmatpush.bf16.msra.mxu0 %v969
        %1026 = vmatpush.bf16.msra.mxu0 %v966
        %1027 = vmatpush.bf16.msra.mxu0 %v963
        %1028 = vmatpush.bf16.msra.mxu0 %v960
        %1029 = vmatmul.bf16.gmra.mxu0 %v838
        %v1030 = vpop.f32.mrf.mxu0
        %v1031 = vadd.f32 %v874, %v1030
        %v1032 = vpop.f32.mrf.mxu0
        %v1033 = vadd.f32 %v874, %v1032
        %1034 = vdwg.mxu0
        %1035 = vmatpush.bf16.msra.mxu0 %v982
        %1036 = vmatpush.bf16.msra.mxu0 %v979
        %1037 = vmatpush.bf16.msra.mxu0 %v976
        %1038 = vmatpush.bf16.msra.mxu0 %v973
        %1039 = vmatpush.bf16.msra.mxu0 %v970
        %1040 = vmatpush.bf16.msra.mxu0 %v967
        %1041 = vmatpush.bf16.msra.mxu0 %v964
        %1042 = vmatpush.bf16.msra.mxu0 %v961
        %1043 = vmatmul.bf16.gmra.mxu0 %v838
        %v1044 = vpop.f32.mrf.mxu0
        %v1045 = vadd.f32 %v875, %v1044
        %v1046 = vpop.f32.mrf.mxu0
        %v1047 = vadd.f32 %v875, %v1046
        %1048 = vdwg.mxu0
        %v1049 = vmul.f32 %v1017, 0.17677669
        %v1050 = vmul.f32 %v1019, 0.17677669
        %v1051 = vlaneseq
        %v1052 = vshrl.u32 %v1051, 7
        %v1053 = vadd.s32 %v1052, 8
        %v1054 = vlaneseq
        %v1055 = vand.u32 %v1054, 127
        %vm1056 = vcmp.gt.s32.totalorder %v1055, %v1052
        %vm1057 = vcmp.gt.s32.totalorder %v1055, %v1053
        %vm1058 = vcmask 261120
        %v1060 = vsel %vm1058, %v1049, 0
        %v1063 = vsel %vm1058, %v1050, 0
        %v1066 = vsel %vm1058, %v1031, 0
        %v1069 = vsel %vm1058, %v1033, 0
        %1071 = vmatpush.xpose.msra.mxu0 0.0
        %1072 = vmatpush.xpose.msra.mxu0 0.0
        %1073 = vmatpush.xpose.msra.mxu0 0.0
        %1074 = vmatpush.xpose.msra.mxu0 0.0
        %1075 = vmatpush.xpose.msra.mxu0 0.0
        %1076 = vmatpush.xpose.msra.mxu0 0.0
        %1077 = vmatpush.xpose.msra.mxu0 0.0
        %1078 = vmatpush.xpose.msra.mxu0 0.0
        %1079 = vmatpush.xpose.msra.mxu0 0.0
        %1080 = vmatpush.xpose.msra.mxu0 0.0
        %1081 = vmatpush.xpose.msra.mxu0 0.0
        %1082 = vmatpush.xpose.msra.mxu0 0.0
        %1083 = vmatpush.xpose.msra.mxu0 0.0
        %1084 = vmatpush.xpose.msra.mxu0 0.0
        %1085 = vmatpush.xpose.msra.mxu0 %v1069
        %1086 = vmatpush.xpose.msra.mxu0 %v1066
        %1087 = vmatmul.f32.gmra.mxu0 %v1060
        %v1088 = vpop.f32.mrf.mxu0
        %v1089 = vadd.f32 0.0, %v1088
        %1090 = vmatmul.f32.gmra.mxu0 %v1063
        %v1091 = vpop.f32.mrf.mxu0
        %v1092 = vadd.f32 0.0, %v1091
        %1093 = vdwg.mxu0
        %v1094 = vsel %vm1056, -1e+30, %v1089
        %v1095 = vsel %vm1057, -1e+30, %v1092
        %vm1096 = vcmask 130048
        %v1097 = vsel %vm1096, %v1094, -inf
        %1098 = vmax.xlane.f32.xlu0 %v1097
        %v1099 = vpop.xlane.xlu0 %1098
        %v1100 = vsel %vm1096, %v1095, -inf
        %1101 = vmax.xlane.f32.xlu0 %v1100
        %v1102 = vpop.xlane.xlu0 %1101
        %v1103 = vsub.f32 %v1094, %v1099
        %v1104 = vsub.f32 %v1095, %v1102
        %v1105 = vmul.f32 %v1103, 1.442695
        %v1106 = vpow.pop %v1105
        %v1107 = vmul.f32 %v1104, 1.442695
        %v1108 = vpow.pop %v1107
        %v1109 = vsel %vm1096, %v1106, 0.0
        %1110 = vadd.xlane.f32.xlu0 %v1109
        %v1111 = vpop.xlane.xlu0 %1110
        %v1112 = vsel %vm1096, %v1108, 0.0
        %1113 = vadd.xlane.f32.xlu0 %v1112
        %v1114 = vpop.xlane.xlu0 %1113
        %v1115 = vrcp.pop %v1111
        %v1116 = vrcp.pop %v1114
        %v1117 = vmul.f32 %v1106, %v1115
        %v1118 = vmul.f32 %v1108, %v1116
        %v1120 = vsel %vm1096, %v1117, 0
        %v1123 = vsel %vm1096, %v1118, 0
        %1125 = vmatpush.msra.mxu0 0.0
        %1126 = vmatpush.msra.mxu0 0.0
        %1127 = vmatpush.msra.mxu0 0.0
        %1128 = vmatpush.msra.mxu0 0.0
        %1129 = vmatpush.msra.mxu0 0.0
        %1130 = vmatpush.msra.mxu0 0.0
        %1131 = vmatpush.msra.mxu0 0.0
        %1132 = vmatpush.msra.mxu0 0.0
        %1133 = vmatpush.msra.mxu0 0.0
        %1134 = vmatpush.msra.mxu0 0.0
        %1135 = vmatpush.msra.mxu0 0.0
        %1136 = vmatpush.msra.mxu0 0.0
        %1137 = vmatpush.msra.mxu0 0.0
        %1138 = vmatpush.msra.mxu0 0.0
        %1139 = vmatpush.msra.mxu0 %v1047
        %1140 = vmatpush.msra.mxu0 %v1045
        %1141 = vmatmul.f32.gmra.mxu0 %v1120
        %v1142 = vpop.f32.mrf.mxu0
        %v1143 = vadd.f32 0.0, %v1142
        %1144 = vmatmul.f32.gmra.mxu0 %v1123
        %v1145 = vpop.f32.mrf.mxu0
        %v1146 = vadd.f32 0.0, %v1145
        %1147 = vdwg.mxu0
        %v1148 = vpack.c.bf16 %v1146, %v1143
        %v1149 = vld [vmem:[%s746] sm:$0xf]
        %v1150 = vld [vmem:[%s746 + $0x4] sm:$0xf]
        %v1151 = vld [vmem:[%s746 + $0x8] sm:$0xf]
        %v1152 = vld [vmem:[%s746 + $0xc] sm:$0xf]
        %1153 = vrot.lane.b32.xlu0 %v1049, 96
        %v1154 = vpop.permute.xlu0 %1153
        %1155 = vrot.lane.b32.xlu0 %v1050, 96
        %v1156 = vpop.permute.xlu0 %1155
        %1157 = vrot.lane.b32.xlu0 %v1031, 96
        %v1158 = vpop.permute.xlu0 %1157
        %1159 = vrot.lane.b32.xlu0 %v1033, 96
        %v1160 = vpop.permute.xlu0 %1159
        %v1161 = vsel %vm1058, %v1154, 0
        %v1163 = vsel %vm1058, %v1156, 0
        %v1165 = vsel %vm1058, %v1158, 0
        %v1167 = vsel %vm1058, %v1160, 0
        %1169 = vmatpush.xpose.msra.mxu0 0.0
        %1170 = vmatpush.xpose.msra.mxu0 0.0
        %1171 = vmatpush.xpose.msra.mxu0 0.0
        %1172 = vmatpush.xpose.msra.mxu0 0.0
        %1173 = vmatpush.xpose.msra.mxu0 0.0
        %1174 = vmatpush.xpose.msra.mxu0 0.0
        %1175 = vmatpush.xpose.msra.mxu0 0.0
        %1176 = vmatpush.xpose.msra.mxu0 0.0
        %1177 = vmatpush.xpose.msra.mxu0 0.0
        %1178 = vmatpush.xpose.msra.mxu0 0.0
        %1179 = vmatpush.xpose.msra.mxu0 0.0
        %1180 = vmatpush.xpose.msra.mxu0 0.0
        %1181 = vmatpush.xpose.msra.mxu0 0.0
        %1182 = vmatpush.xpose.msra.mxu0 0.0
        %1183 = vmatpush.xpose.msra.mxu0 %v1167
        %1184 = vmatpush.xpose.msra.mxu0 %v1165
        %1185 = vmatmul.f32.gmra.mxu0 %v1161
        %v1186 = vpop.f32.mrf.mxu0
        %v1187 = vadd.f32 0.0, %v1186
        %1188 = vmatmul.f32.gmra.mxu0 %v1163
        %v1189 = vpop.f32.mrf.mxu0
        %v1190 = vadd.f32 0.0, %v1189
        %1191 = vdwg.mxu0
        %v1192 = vsel %vm1056, -1e+30, %v1187
        %v1193 = vsel %vm1057, -1e+30, %v1190
        %v1194 = vsel %vm1096, %v1192, -inf
        %1195 = vmax.xlane.f32.xlu0 %v1194
        %v1196 = vpop.xlane.xlu0 %1195
        %v1197 = vsel %vm1096, %v1193, -inf
        %1198 = vmax.xlane.f32.xlu0 %v1197
        %v1199 = vpop.xlane.xlu0 %1198
        %v1200 = vsub.f32 %v1192, %v1196
        %v1201 = vsub.f32 %v1193, %v1199
        %v1202 = vmul.f32 %v1200, 1.442695
        %v1203 = vpow.pop %v1202
        %v1204 = vmul.f32 %v1201, 1.442695
        %v1205 = vpow.pop %v1204
        %v1206 = vsel %vm1096, %v1203, 0.0
        %1207 = vadd.xlane.f32.xlu0 %v1206
        %v1208 = vpop.xlane.xlu0 %1207
        %v1209 = vsel %vm1096, %v1205, 0.0
        %1210 = vadd.xlane.f32.xlu0 %v1209
        %v1211 = vpop.xlane.xlu0 %1210
        %v1212 = vrcp.pop %v1208
        %v1213 = vrcp.pop %v1211
        %v1214 = vmul.f32 %v1203, %v1212
        %v1215 = vmul.f32 %v1205, %v1213
        %1218 = vrot.lane.b32.xlu0 %v1045, 96
        %v1219 = vpop.permute.xlu0 %1218
        %1220 = vrot.lane.b32.xlu0 %v1047, 96
        %v1221 = vpop.permute.xlu0 %1220
        %v1225 = vsel %vm1096, %v1214, 0
        %v1228 = vsel %vm1096, %v1215, 0
        %1230 = vmatpush.msra.mxu0 0.0
        %1231 = vmatpush.msra.mxu0 0.0
        %1232 = vmatpush.msra.mxu0 0.0
        %1233 = vmatpush.msra.mxu0 0.0
        %1234 = vmatpush.msra.mxu0 0.0
        %1235 = vmatpush.msra.mxu0 0.0
        %1236 = vmatpush.msra.mxu0 0.0
        %1237 = vmatpush.msra.mxu0 0.0
        %1238 = vmatpush.msra.mxu0 0.0
        %1239 = vmatpush.msra.mxu0 0.0
        %1240 = vmatpush.msra.mxu0 0.0
        %1241 = vmatpush.msra.mxu0 0.0
        %1242 = vmatpush.msra.mxu0 0.0
        %1243 = vmatpush.msra.mxu0 0.0
        %1244 = vmatpush.msra.mxu0 %v1221
        %1245 = vmatpush.msra.mxu0 %v1219
        %1246 = vmatmul.f32.gmra.mxu0 %v1225
        %v1247 = vpop.f32.mrf.mxu0
        %v1248 = vadd.f32 0.0, %v1247
        %1249 = vmatmul.f32.gmra.mxu0 %v1228
        %v1250 = vpop.f32.mrf.mxu0
        %v1251 = vadd.f32 0.0, %v1250
        %1252 = vdwg.mxu0
        %v1253 = vpack.c.bf16 %v1251, %v1248
        %v1254 = vld [vmem:[%s746 + $0x10] sm:$0xf]
        %v1255 = vld [vmem:[%s746 + $0x14] sm:$0xf]
        %v1256 = vld [vmem:[%s746 + $0x18] sm:$0xf]
        %v1257 = vld [vmem:[%s746 + $0x1c] sm:$0xf]
        %v1262 = vunpack.c.l.b16 %v1254
        %v1263 = vunpack.c.l.b16 %v1255
        %v1264 = vunpack.c.l.b16 %v1256
        %v1265 = vunpack.c.l.b16 %v1257
        %v1266 = vpack.c.b16 %v1263, %v1262
        %v1267 = vpack.c.b16 %v1265, %v1264
        %v1271 = vsel %vm1058, %v1253, 0
        %1273 = vmatpush.bf16.msra.mxu0 0
        %1274 = vmatpush.bf16.msra.mxu0 0
        %1275 = vmatpush.bf16.msra.mxu0 0
        %1276 = vmatpush.bf16.msra.mxu0 0
        %1277 = vmatpush.bf16.msra.mxu0 0
        %1278 = vmatpush.bf16.msra.mxu0 0
        %1279 = vmatpush.bf16.msra.mxu0 %v1267
        %1280 = vmatpush.bf16.msra.mxu0 %v1266
        %1281 = vmatmul.bf16.gmra.mxu0 %v1271
        %v1282 = vpop.f32.mrf.mxu0
        %v1283 = vadd.f32 0.0, %v1282
        %v1284 = vpop.f32.mrf.mxu0
        %v1285 = vadd.f32 0.0, %v1284
        %1286 = vdwg.mxu0
        %v1291 = vunpack.c.l.b16 %v1149
        %v1292 = vunpack.c.l.b16 %v1150
        %v1293 = vunpack.c.l.b16 %v1151
        %v1294 = vunpack.c.l.b16 %v1152
        %v1295 = vpack.c.b16 %v1292, %v1291
        %v1296 = vpack.c.b16 %v1294, %v1293
        %v1300 = vsel %vm1058, %v1148, 0
        %1302 = vmatpush.bf16.msra.mxu0 0
        %1303 = vmatpush.bf16.msra.mxu0 0
        %1304 = vmatpush.bf16.msra.mxu0 0
        %1305 = vmatpush.bf16.msra.mxu0 0
        %1306 = vmatpush.bf16.msra.mxu0 0
        %1307 = vmatpush.bf16.msra.mxu0 0
        %1308 = vmatpush.bf16.msra.mxu0 %v1296
        %1309 = vmatpush.bf16.msra.mxu0 %v1295
        %1310 = vmatmul.bf16.gmra.mxu0 %v1300
        %v1311 = vpop.f32.mrf.mxu0
        %v1312 = vadd.f32 %v1283, %v1311
        %v1313 = vpop.f32.mrf.mxu0
        %v1314 = vadd.f32 %v1285, %v1313
        %1315 = vdwg.mxu0
        %1316 = vrot.lane.b32.xlu0 %v1049, 64
        %v1317 = vpop.permute.xlu0 %1316
        %1318 = vrot.lane.b32.xlu0 %v1050, 64
        %v1319 = vpop.permute.xlu0 %1318
        %1320 = vrot.lane.b32.xlu0 %v1031, 64
        %v1321 = vpop.permute.xlu0 %1320
        %1322 = vrot.lane.b32.xlu0 %v1033, 64
        %v1323 = vpop.permute.xlu0 %1322
        %v1324 = vsel %vm1058, %v1317, 0
        %v1326 = vsel %vm1058, %v1319, 0
        %v1328 = vsel %vm1058, %v1321, 0
        %v1330 = vsel %vm1058, %v1323, 0
        %1332 = vmatpush.xpose.msra.mxu0 0.0
        %1333 = vmatpush.xpose.msra.mxu0 0.0
        %1334 = vmatpush.xpose.msra.mxu0 0.0
        %1335 = vmatpush.xpose.msra.mxu0 0.0
        %1336 = vmatpush.xpose.msra.mxu0 0.0
        %1337 = vmatpush.xpose.msra.mxu0 0.0
        %1338 = vmatpush.xpose.msra.mxu0 0.0
        %1339 = vmatpush.xpose.msra.mxu0 0.0
        %1340 = vmatpush.xpose.msra.mxu0 0.0
        %1341 = vmatpush.xpose.msra.mxu0 0.0
        %1342 = vmatpush.xpose.msra.mxu0 0.0
        %1343 = vmatpush.xpose.msra.mxu0 0.0
        %1344 = vmatpush.xpose.msra.mxu0 0.0
        %1345 = vmatpush.xpose.msra.mxu0 0.0
        %1346 = vmatpush.xpose.msra.mxu0 %v1330
        %1347 = vmatpush.xpose.msra.mxu0 %v1328
        %1348 = vmatmul.f32.gmra.mxu0 %v1324
        %v1349 = vpop.f32.mrf.mxu0
        %v1350 = vadd.f32 0.0, %v1349
        %1351 = vmatmul.f32.gmra.mxu0 %v1326
        %v1352 = vpop.f32.mrf.mxu0
        %v1353 = vadd.f32 0.0, %v1352
        %1354 = vdwg.mxu0
        %v1355 = vsel %vm1056, -1e+30, %v1350
        %v1356 = vsel %vm1057, -1e+30, %v1353
        %v1357 = vsel %vm1096, %v1355, -inf
        %1358 = vmax.xlane.f32.xlu0 %v1357
        %v1359 = vpop.xlane.xlu0 %1358
        %v1360 = vsel %vm1096, %v1356, -inf
        %1361 = vmax.xlane.f32.xlu0 %v1360
        %v1362 = vpop.xlane.xlu0 %1361
        %v1363 = vsub.f32 %v1355, %v1359
        %v1364 = vsub.f32 %v1356, %v1362
        %v1365 = vmul.f32 %v1363, 1.442695
        %v1366 = vpow.pop %v1365
        %v1367 = vmul.f32 %v1364, 1.442695
        %v1368 = vpow.pop %v1367
        %v1369 = vsel %vm1096, %v1366, 0.0
        %1370 = vadd.xlane.f32.xlu0 %v1369
        %v1371 = vpop.xlane.xlu0 %1370
        %v1372 = vsel %vm1096, %v1368, 0.0
        %1373 = vadd.xlane.f32.xlu0 %v1372
        %v1374 = vpop.xlane.xlu0 %1373
        %v1375 = vrcp.pop %v1371
        %v1376 = vrcp.pop %v1374
        %v1377 = vmul.f32 %v1366, %v1375
        %v1378 = vmul.f32 %v1368, %v1376
        %1379 = vrot.lane.b32.xlu0 %v1045, 64
        %v1380 = vpop.permute.xlu0 %1379
        %1381 = vrot.lane.b32.xlu0 %v1047, 64
        %v1382 = vpop.permute.xlu0 %1381
        %v1386 = vsel %vm1096, %v1377, 0
        %v1389 = vsel %vm1096, %v1378, 0
        %1391 = vmatpush.msra.mxu0 0.0
        %1392 = vmatpush.msra.mxu0 0.0
        %1393 = vmatpush.msra.mxu0 0.0
        %1394 = vmatpush.msra.mxu0 0.0
        %1395 = vmatpush.msra.mxu0 0.0
        %1396 = vmatpush.msra.mxu0 0.0
        %1397 = vmatpush.msra.mxu0 0.0
        %1398 = vmatpush.msra.mxu0 0.0
        %1399 = vmatpush.msra.mxu0 0.0
        %1400 = vmatpush.msra.mxu0 0.0
        %1401 = vmatpush.msra.mxu0 0.0
        %1402 = vmatpush.msra.mxu0 0.0
        %1403 = vmatpush.msra.mxu0 0.0
        %1404 = vmatpush.msra.mxu0 0.0
        %1405 = vmatpush.msra.mxu0 %v1382
        %1406 = vmatpush.msra.mxu0 %v1380
        %1407 = vmatmul.f32.gmra.mxu0 %v1386
        %v1408 = vpop.f32.mrf.mxu0
        %v1409 = vadd.f32 0.0, %v1408
        %1410 = vmatmul.f32.gmra.mxu0 %v1389
        %v1411 = vpop.f32.mrf.mxu0
        %v1412 = vadd.f32 0.0, %v1411
        %1413 = vdwg.mxu0
        %v1414 = vpack.c.bf16 %v1412, %v1409
        %v1415 = vld [vmem:[%s746 + $0x20] sm:$0xf]
        %v1416 = vld [vmem:[%s746 + $0x24] sm:$0xf]
        %v1417 = vld [vmem:[%s746 + $0x28] sm:$0xf]
        %v1418 = vld [vmem:[%s746 + $0x2c] sm:$0xf]
        %v1423 = vunpack.c.l.b16 %v1415
        %v1424 = vunpack.c.l.b16 %v1416
        %v1425 = vunpack.c.l.b16 %v1417
        %v1426 = vunpack.c.l.b16 %v1418
        %v1427 = vpack.c.b16 %v1424, %v1423
        %v1428 = vpack.c.b16 %v1426, %v1425
        %v1432 = vsel %vm1058, %v1414, 0
        %1434 = vmatpush.bf16.msra.mxu0 0
        %1435 = vmatpush.bf16.msra.mxu0 0
        %1436 = vmatpush.bf16.msra.mxu0 0
        %1437 = vmatpush.bf16.msra.mxu0 0
        %1438 = vmatpush.bf16.msra.mxu0 0
        %1439 = vmatpush.bf16.msra.mxu0 0
        %1440 = vmatpush.bf16.msra.mxu0 %v1428
        %1441 = vmatpush.bf16.msra.mxu0 %v1427
        %1442 = vmatmul.bf16.gmra.mxu0 %v1432
        %v1443 = vpop.f32.mrf.mxu0
        %v1444 = vadd.f32 0.0, %v1443
        %v1445 = vpop.f32.mrf.mxu0
        %v1446 = vadd.f32 0.0, %v1445
        %1447 = vdwg.mxu0
        %v1448 = vadd.f32 %v1312, %v1444
        %v1449 = vadd.f32 %v1314, %v1446
        %1450 = vrot.lane.b32.xlu0 %v1049, 32
        %v1451 = vpop.permute.xlu0 %1450
        %1452 = vrot.lane.b32.xlu0 %v1050, 32
        %v1453 = vpop.permute.xlu0 %1452
        %1454 = vrot.lane.b32.xlu0 %v1031, 32
        %v1455 = vpop.permute.xlu0 %1454
        %1456 = vrot.lane.b32.xlu0 %v1033, 32
        %v1457 = vpop.permute.xlu0 %1456
        %v1458 = vsel %vm1058, %v1451, 0
        %v1460 = vsel %vm1058, %v1453, 0
        %v1462 = vsel %vm1058, %v1455, 0
        %v1464 = vsel %vm1058, %v1457, 0
        %1466 = vmatpush.xpose.msra.mxu0 0.0
        %1467 = vmatpush.xpose.msra.mxu0 0.0
        %1468 = vmatpush.xpose.msra.mxu0 0.0
        %1469 = vmatpush.xpose.msra.mxu0 0.0
        %1470 = vmatpush.xpose.msra.mxu0 0.0
        %1471 = vmatpush.xpose.msra.mxu0 0.0
        %1472 = vmatpush.xpose.msra.mxu0 0.0
        %1473 = vmatpush.xpose.msra.mxu0 0.0
        %1474 = vmatpush.xpose.msra.mxu0 0.0
        %1475 = vmatpush.xpose.msra.mxu0 0.0
        %1476 = vmatpush.xpose.msra.mxu0 0.0
        %1477 = vmatpush.xpose.msra.mxu0 0.0
        %1478 = vmatpush.xpose.msra.mxu0 0.0
        %1479 = vmatpush.xpose.msra.mxu0 0.0
        %1480 = vmatpush.xpose.msra.mxu0 %v1464
        %1481 = vmatpush.xpose.msra.mxu0 %v1462
        %1482 = vmatmul.f32.gmra.mxu0 %v1458
        %v1483 = vpop.f32.mrf.mxu0
        %v1484 = vadd.f32 0.0, %v1483
        %1485 = vmatmul.f32.gmra.mxu0 %v1460
        %v1486 = vpop.f32.mrf.mxu0
        %v1487 = vadd.f32 0.0, %v1486
        %1488 = vdwg.mxu0
        %v1489 = vsel %vm1056, -1e+30, %v1484
        %v1490 = vsel %vm1057, -1e+30, %v1487
        %v1491 = vsel %vm1096, %v1489, -inf
        %1492 = vmax.xlane.f32.xlu0 %v1491
        %v1493 = vpop.xlane.xlu0 %1492
        %v1494 = vsel %vm1096, %v1490, -inf
        %1495 = vmax.xlane.f32.xlu0 %v1494
        %v1496 = vpop.xlane.xlu0 %1495
        %v1497 = vsub.f32 %v1489, %v1493
        %v1498 = vsub.f32 %v1490, %v1496
        %v1499 = vmul.f32 %v1497, 1.442695
        %v1500 = vpow.pop %v1499
        %v1501 = vmul.f32 %v1498, 1.442695
        %v1502 = vpow.pop %v1501
        %v1503 = vsel %vm1096, %v1500, 0.0
        %1504 = vadd.xlane.f32.xlu0 %v1503
        %v1505 = vpop.xlane.xlu0 %1504
        %v1506 = vsel %vm1096, %v1502, 0.0
        %1507 = vadd.xlane.f32.xlu0 %v1506
        %v1508 = vpop.xlane.xlu0 %1507
        %v1509 = vrcp.pop %v1505
        %v1510 = vrcp.pop %v1508
        %v1511 = vmul.f32 %v1500, %v1509
        %v1512 = vmul.f32 %v1502, %v1510
        %1513 = vrot.lane.b32.xlu0 %v1045, 32
        %v1514 = vpop.permute.xlu0 %1513
        %1515 = vrot.lane.b32.xlu0 %v1047, 32
        %v1516 = vpop.permute.xlu0 %1515
        %v1520 = vsel %vm1096, %v1511, 0
        %v1523 = vsel %vm1096, %v1512, 0
        %1525 = vmatpush.msra.mxu0 0.0
        %1526 = vmatpush.msra.mxu0 0.0
        %1527 = vmatpush.msra.mxu0 0.0
        %1528 = vmatpush.msra.mxu0 0.0
        %1529 = vmatpush.msra.mxu0 0.0
        %1530 = vmatpush.msra.mxu0 0.0
        %1531 = vmatpush.msra.mxu0 0.0
        %1532 = vmatpush.msra.mxu0 0.0
        %1533 = vmatpush.msra.mxu0 0.0
        %1534 = vmatpush.msra.mxu0 0.0
        %1535 = vmatpush.msra.mxu0 0.0
        %1536 = vmatpush.msra.mxu0 0.0
        %1537 = vmatpush.msra.mxu0 0.0
        %1538 = vmatpush.msra.mxu0 0.0
        %1539 = vmatpush.msra.mxu0 %v1516
        %1540 = vmatpush.msra.mxu0 %v1514
        %1541 = vmatmul.f32.gmra.mxu0 %v1520
        %v1542 = vpop.f32.mrf.mxu0
        %v1543 = vadd.f32 0.0, %v1542
        %1544 = vmatmul.f32.gmra.mxu0 %v1523
        %v1545 = vpop.f32.mrf.mxu0
        %v1546 = vadd.f32 0.0, %v1545
        %1547 = vdwg.mxu0
        %v1548 = vpack.c.bf16 %v1546, %v1543
        %v1549 = vld [vmem:[%s746 + $0x30] sm:$0xf]
        %v1550 = vld [vmem:[%s746 + $0x34] sm:$0xf]
        %v1551 = vld [vmem:[%s746 + $0x38] sm:$0xf]
        %v1552 = vld [vmem:[%s746 + $0x3c] sm:$0xf]
        %v1557 = vunpack.c.l.b16 %v1549
        %v1558 = vunpack.c.l.b16 %v1550
        %v1559 = vunpack.c.l.b16 %v1551
        %v1560 = vunpack.c.l.b16 %v1552
        %v1561 = vpack.c.b16 %v1558, %v1557
        %v1562 = vpack.c.b16 %v1560, %v1559
        %v1566 = vsel %vm1058, %v1548, 0
        %1568 = vmatpush.bf16.msra.mxu0 0
        %1569 = vmatpush.bf16.msra.mxu0 0
        %1570 = vmatpush.bf16.msra.mxu0 0
        %1571 = vmatpush.bf16.msra.mxu0 0
        %1572 = vmatpush.bf16.msra.mxu0 0
        %1573 = vmatpush.bf16.msra.mxu0 0
        %1574 = vmatpush.bf16.msra.mxu0 %v1562
        %1575 = vmatpush.bf16.msra.mxu0 %v1561
        %1576 = vmatmul.bf16.gmra.mxu0 %v1566
        %v1577 = vpop.f32.mrf.mxu0
        %v1578 = vadd.f32 0.0, %v1577
        %v1579 = vpop.f32.mrf.mxu0
        %v1580 = vadd.f32 0.0, %v1579
        %1581 = vdwg.mxu0
        %v1582 = vadd.f32 %v1448, %v1578
        %v1583 = vadd.f32 %v1449, %v1580
        %v1584 = vadd.f32 %v777, %v1582
        %v1585 = vadd.f32 %v778, %v1583
        %v1586 = vld [vmem:[%s749] sm:$0x1]
        %v1588 = vperm.slane %v1586, 0
        %v1590 = vadd.f32 %v1584, %v1588
        %v1591 = vadd.f32 %v1585, %v1588
        %v1592 = vld [vmem:[%s752] sm:$0x1]
        %v1593 = vld [vmem:[%s755] sm:$0x1]
        %1594 = vadd.xlane.f32.xlu0 %v1590
        %v1595 = vpop.xlane.xlu0 %1594
        %1596 = vadd.xlane.f32.xlu0 %v1591
        %v1597 = vpop.xlane.xlu0 %1596
        %v1598 = vmul.f32 %v1595, %v791
        %v1599 = vmul.f32 %v1597, %v791
        %v1600 = vsub.f32 %v1590, %v1598
        %v1601 = vsub.f32 %v1591, %v1599
        %v1602 = vmul.f32 %v1600, %v1600
        %v1603 = vmul.f32 %v1601, %v1601
        %1604 = vadd.xlane.f32.xlu0 %v1602
        %v1605 = vpop.xlane.xlu0 %1604
        %1606 = vadd.xlane.f32.xlu0 %v1603
        %v1607 = vpop.xlane.xlu0 %1606
        %v1608 = vmul.f32 %v1605, %v791
        %v1609 = vmul.f32 %v1607, %v791
        %v1610 = vadd.f32 %v1608, 1e-05
        %v1611 = vadd.f32 %v1609, 1e-05
        %v1612 = vrsqrt.pop %v1610
        %v1613 = vmul.f32 %v1612, %v1610
        %v1614 = vmul.f32 %v1613, %v1612
        %v1615 = vmul.f32 0.5, %v1614
        %v1616 = vsub.f32 1.5, %v1615
        %v1617 = vmul.f32 %v1612, %v1616
        %vm1618 = vweird.f32 %v1610
        %vm1619 = vweird.f32 %v1612
        %vm1620 = vmor %vm1618, %vm1619
        %v1621 = vsel %vm1620, %v1612, %v1617
        %v1622 = vrsqrt.pop %v1611
        %v1623 = vmul.f32 %v1622, %v1611
        %v1624 = vmul.f32 %v1623, %v1622
        %v1625 = vmul.f32 0.5, %v1624
        %v1626 = vsub.f32 1.5, %v1625
        %v1627 = vmul.f32 %v1622, %v1626
        %vm1628 = vweird.f32 %v1611
        %vm1629 = vweird.f32 %v1622
        %vm1630 = vmor %vm1628, %vm1629
        %v1631 = vsel %vm1630, %v1622, %v1627
        %v1632 = vmul.f32 %v1600, %v1621
        %v1633 = vmul.f32 %v1601, %v1631
        %v1635 = vperm.slane %v1592, 0
        %v1637 = vmul.f32 %v1632, %v1635
        %v1638 = vmul.f32 %v1633, %v1635
        %v1640 = vperm.slane %v1593, 0
        %v1642 = vadd.f32 %v1637, %v1640
        %v1643 = vadd.f32 %v1638, %v1640
        %v1644 = vpack.c.bf16 %v1643, %v1642
        %v1645 = vld [vmem:[%s623] sm:$0xff]
        %v1646 = vld [vmem:[%s623 + $0x8] sm:$0xff]
        %v1647 = vld [vmem:[%s623 + $0x10] sm:$0xff]
        %v1648 = vld [vmem:[%s623 + $0x18] sm:$0xff]
        %v1649 = vld [vmem:[%s623 + $0x20] sm:$0xff]
        %v1650 = vld [vmem:[%s623 + $0x28] sm:$0xff]
        %v1651 = vld [vmem:[%s623 + $0x30] sm:$0xff]
        %v1652 = vld [vmem:[%s623 + $0x38] sm:$0xff]
        %v1653 = vld [vmem:[%s623 + $0x40] sm:$0xff]
        %v1654 = vld [vmem:[%s623 + $0x48] sm:$0xff]
        %v1655 = vld [vmem:[%s623 + $0x50] sm:$0xff]
        %v1656 = vld [vmem:[%s623 + $0x58] sm:$0xff]
        %v1657 = vld [vmem:[%s623 + $0x60] sm:$0xff]
        %v1658 = vld [vmem:[%s623 + $0x68] sm:$0xff]
        %v1659 = vld [vmem:[%s623 + $0x70] sm:$0xff]
        %v1660 = vld [vmem:[%s623 + $0x78] sm:$0xff]
        %v1661 = vld [vmem:[%s623 + $0x80] sm:$0xff]
        %v1662 = vld [vmem:[%s623 + $0x88] sm:$0xff]
        %v1663 = vld [vmem:[%s623 + $0x90] sm:$0xff]
        %v1664 = vld [vmem:[%s623 + $0x98] sm:$0xff]
        %v1665 = vld [vmem:[%s623 + $0xa0] sm:$0xff]
        %v1666 = vld [vmem:[%s623 + $0xa8] sm:$0xff]
        %v1667 = vld [vmem:[%s623 + $0xb0] sm:$0xff]
        %v1668 = vld [vmem:[%s623 + $0xb8] sm:$0xff]
        %v1669 = vld [vmem:[%s623 + $0xc0] sm:$0xff]
        %v1670 = vld [vmem:[%s623 + $0xc8] sm:$0xff]
        %v1671 = vld [vmem:[%s623 + $0xd0] sm:$0xff]
        %v1672 = vld [vmem:[%s623 + $0xd8] sm:$0xff]
        %v1673 = vld [vmem:[%s623 + $0xe0] sm:$0xff]
        %v1674 = vld [vmem:[%s623 + $0xe8] sm:$0xff]
        %v1675 = vld [vmem:[%s623 + $0xf0] sm:$0xff]
        %v1676 = vld [vmem:[%s623 + $0xf8] sm:$0xff]
        %v1677 = vld [vmem:[%s759] sm:$0xf]
        %v1679 = vperm.slane %v1677, 0
        %v1680 = vperm.slane %v1677, 1
        %v1681 = vperm.slane %v1677, 2
        %v1682 = vperm.slane %v1677, 3
        %v1719 = vunpack.c.l.b16 %v1645
        %v1720 = vunpack.c.h.b16 %v1645
        %v1721 = vunpack.c.l.b16 %v1646
        %v1722 = vunpack.c.h.b16 %v1646
        %v1723 = vunpack.c.l.b16 %v1647
        %v1724 = vunpack.c.h.b16 %v1647
        %v1725 = vunpack.c.l.b16 %v1648
        %v1726 = vunpack.c.h.b16 %v1648
        %v1727 = vunpack.c.l.b16 %v1649
        %v1728 = vunpack.c.h.b16 %v1649
        %v1729 = vunpack.c.l.b16 %v1650
        %v1730 = vunpack.c.h.b16 %v1650
        %v1731 = vunpack.c.l.b16 %v1651
        %v1732 = vunpack.c.h.b16 %v1651
        %v1733 = vunpack.c.l.b16 %v1652
        %v1734 = vunpack.c.h.b16 %v1652
        %v1735 = vunpack.c.l.b16 %v1653
        %v1736 = vunpack.c.h.b16 %v1653
        %v1737 = vunpack.c.l.b16 %v1654
        %v1738 = vunpack.c.h.b16 %v1654
        %v1739 = vunpack.c.l.b16 %v1655
        %v1740 = vunpack.c.h.b16 %v1655
        %v1741 = vunpack.c.l.b16 %v1656
        %v1742 = vunpack.c.h.b16 %v1656
        %v1743 = vunpack.c.l.b16 %v1657
        %v1744 = vunpack.c.h.b16 %v1657
        %v1745 = vunpack.c.l.b16 %v1658
        %v1746 = vunpack.c.h.b16 %v1658
        %v1747 = vunpack.c.l.b16 %v1659
        %v1748 = vunpack.c.h.b16 %v1659
        %v1749 = vunpack.c.l.b16 %v1660
        %v1750 = vunpack.c.h.b16 %v1660
        %v1751 = vunpack.c.l.b16 %v1661
        %v1752 = vunpack.c.h.b16 %v1661
        %v1753 = vunpack.c.l.b16 %v1662
        %v1754 = vunpack.c.h.b16 %v1662
        %v1755 = vunpack.c.l.b16 %v1663
        %v1756 = vunpack.c.h.b16 %v1663
        %v1757 = vunpack.c.l.b16 %v1664
        %v1758 = vunpack.c.h.b16 %v1664
        %v1759 = vunpack.c.l.b16 %v1665
        %v1760 = vunpack.c.h.b16 %v1665
        %v1761 = vunpack.c.l.b16 %v1666
        %v1762 = vunpack.c.h.b16 %v1666
        %v1763 = vunpack.c.l.b16 %v1667
        %v1764 = vunpack.c.h.b16 %v1667
        %v1765 = vunpack.c.l.b16 %v1668
        %v1766 = vunpack.c.h.b16 %v1668
        %v1767 = vunpack.c.l.b16 %v1669
        %v1768 = vunpack.c.h.b16 %v1669
        %v1769 = vunpack.c.l.b16 %v1670
        %v1770 = vunpack.c.h.b16 %v1670
        %v1771 = vunpack.c.l.b16 %v1671
        %v1772 = vunpack.c.h.b16 %v1671
        %v1773 = vunpack.c.l.b16 %v1672
        %v1774 = vunpack.c.h.b16 %v1672
        %v1775 = vunpack.c.l.b16 %v1673
        %v1776 = vunpack.c.h.b16 %v1673
        %v1777 = vunpack.c.l.b16 %v1674
        %v1778 = vunpack.c.h.b16 %v1674
        %v1779 = vunpack.c.l.b16 %v1675
        %v1780 = vunpack.c.h.b16 %v1675
        %v1781 = vunpack.c.l.b16 %v1676
        %v1782 = vunpack.c.h.b16 %v1676
        %v1783 = vpack.c.b16 %v1723, %v1719
        %v1784 = vpack.c.b16 %v1724, %v1720
        %v1785 = vpack.c.b16 %v1725, %v1721
        %v1786 = vpack.c.b16 %v1726, %v1722
        %v1787 = vpack.c.b16 %v1731, %v1727
        %v1788 = vpack.c.b16 %v1732, %v1728
        %v1789 = vpack.c.b16 %v1733, %v1729
        %v1790 = vpack.c.b16 %v1734, %v1730
        %v1791 = vpack.c.b16 %v1739, %v1735
        %v1792 = vpack.c.b16 %v1740, %v1736
        %v1793 = vpack.c.b16 %v1741, %v1737
        %v1794 = vpack.c.b16 %v1742, %v1738
        %v1795 = vpack.c.b16 %v1747, %v1743
        %v1796 = vpack.c.b16 %v1748, %v1744
        %v1797 = vpack.c.b16 %v1749, %v1745
        %v1798 = vpack.c.b16 %v1750, %v1746
        %v1799 = vpack.c.b16 %v1755, %v1751
        %v1800 = vpack.c.b16 %v1756, %v1752
        %v1801 = vpack.c.b16 %v1757, %v1753
        %v1802 = vpack.c.b16 %v1758, %v1754
        %v1803 = vpack.c.b16 %v1763, %v1759
        %v1804 = vpack.c.b16 %v1764, %v1760
        %v1805 = vpack.c.b16 %v1765, %v1761
        %v1806 = vpack.c.b16 %v1766, %v1762
        %v1807 = vpack.c.b16 %v1771, %v1767
        %v1808 = vpack.c.b16 %v1772, %v1768
        %v1809 = vpack.c.b16 %v1773, %v1769
        %v1810 = vpack.c.b16 %v1774, %v1770
        %v1811 = vpack.c.b16 %v1779, %v1775
        %v1812 = vpack.c.b16 %v1780, %v1776
        %v1813 = vpack.c.b16 %v1781, %v1777
        %v1814 = vpack.c.b16 %v1782, %v1778
        %1847 = vmatpush.bf16.msra.mxu0 %v1811
        %1848 = vmatpush.bf16.msra.mxu0 %v1807
        %1849 = vmatpush.bf16.msra.mxu0 %v1803
        %1850 = vmatpush.bf16.msra.mxu0 %v1799
        %1851 = vmatpush.bf16.msra.mxu0 %v1795
        %1852 = vmatpush.bf16.msra.mxu0 %v1791
        %1853 = vmatpush.bf16.msra.mxu0 %v1787
        %1854 = vmatpush.bf16.msra.mxu0 %v1783
        %1855 = vmatmul.bf16.gmra.mxu0 %v1644
        %v1856 = vpop.f32.mrf.mxu0
        %v1857 = vadd.f32 %v1679, %v1856
        %v1858 = vpop.f32.mrf.mxu0
        %v1859 = vadd.f32 %v1679, %v1858
        %1860 = vdwg.mxu0
        %1861 = vmatpush.bf16.msra.mxu0 %v1812
        %1862 = vmatpush.bf16.msra.mxu0 %v1808
        %1863 = vmatpush.bf16.msra.mxu0 %v1804
        %1864 = vmatpush.bf16.msra.mxu0 %v1800
        %1865 = vmatpush.bf16.msra.mxu0 %v1796
        %1866 = vmatpush.bf16.msra.mxu0 %v1792
        %1867 = vmatpush.bf16.msra.mxu0 %v1788
        %1868 = vmatpush.bf16.msra.mxu0 %v1784
        %1869 = vmatmul.bf16.gmra.mxu0 %v1644
        %v1870 = vpop.f32.mrf.mxu0
        %v1871 = vadd.f32 %v1680, %v1870
        %v1872 = vpop.f32.mrf.mxu0
        %v1873 = vadd.f32 %v1680, %v1872
        %1874 = vdwg.mxu0
        %1875 = vmatpush.bf16.msra.mxu0 %v1813
        %1876 = vmatpush.bf16.msra.mxu0 %v1809
        %1877 = vmatpush.bf16.msra.mxu0 %v1805
        %1878 = vmatpush.bf16.msra.mxu0 %v1801
        %1879 = vmatpush.bf16.msra.mxu0 %v1797
        %1880 = vmatpush.bf16.msra.mxu0 %v1793
        %1881 = vmatpush.bf16.msra.mxu0 %v1789
        %1882 = vmatpush.bf16.msra.mxu0 %v1785
        %1883 = vmatmul.bf16.gmra.mxu0 %v1644
        %v1884 = vpop.f32.mrf.mxu0
        %v1885 = vadd.f32 %v1681, %v1884
        %v1886 = vpop.f32.mrf.mxu0
        %v1887 = vadd.f32 %v1681, %v1886
        %1888 = vdwg.mxu0
        %1889 = vmatpush.bf16.msra.mxu0 %v1814
        %1890 = vmatpush.bf16.msra.mxu0 %v1810
        %1891 = vmatpush.bf16.msra.mxu0 %v1806
        %1892 = vmatpush.bf16.msra.mxu0 %v1802
        %1893 = vmatpush.bf16.msra.mxu0 %v1798
        %1894 = vmatpush.bf16.msra.mxu0 %v1794
        %1895 = vmatpush.bf16.msra.mxu0 %v1790
        %1896 = vmatpush.bf16.msra.mxu0 %v1786
        %1897 = vmatmul.bf16.gmra.mxu0 %v1644
        %v1898 = vpop.f32.mrf.mxu0
        %v1899 = vadd.f32 %v1682, %v1898
        %v1900 = vpop.f32.mrf.mxu0
        %v1901 = vadd.f32 %v1682, %v1900
        %1902 = vdwg.mxu0
        %v1903 = vmul.f32 %v1857, 1.702
        %v1904 = vmul.f32 %v1871, 1.702
        %v1905 = vmul.f32 %v1885, 1.702
        %v1906 = vmul.f32 %v1899, 1.702
        %v1907 = vmul.f32 %v1859, 1.702
        %v1908 = vmul.f32 %v1873, 1.702
        %v1909 = vmul.f32 %v1887, 1.702
        %v1910 = vmul.f32 %v1901, 1.702
        %v1911 = vxor.u32 %v1903, 2147483648
        %v1912 = vxor.u32 %v1904, 2147483648
        %v1913 = vxor.u32 %v1905, 2147483648
        %v1914 = vxor.u32 %v1906, 2147483648
        %v1915 = vxor.u32 %v1907, 2147483648
        %v1916 = vxor.u32 %v1908, 2147483648
        %v1917 = vxor.u32 %v1909, 2147483648
        %v1918 = vxor.u32 %v1910, 2147483648
        %v1919 = vmul.f32 %v1911, 1.442695
        %v1920 = vpow.pop %v1919
        %v1921 = vmul.f32 %v1912, 1.442695
        %v1922 = vpow.pop %v1921
        %v1923 = vmul.f32 %v1913, 1.442695
        %v1924 = vpow.pop %v1923
        %v1925 = vmul.f32 %v1914, 1.442695
        %v1926 = vpow.pop %v1925
        %v1927 = vmul.f32 %v1915, 1.442695
        %v1928 = vpow.pop %v1927
        %v1929 = vmul.f32 %v1916, 1.442695
        %v1930 = vpow.pop %v1929
        %v1931 = vmul.f32 %v1917, 1.442695
        %v1932 = vpow.pop %v1931
        %v1933 = vmul.f32 %v1918, 1.442695
        %v1934 = vpow.pop %v1933
        %v1935 = vadd.f32 %v1920, 1.0
        %v1936 = vadd.f32 %v1922, 1.0
        %v1937 = vadd.f32 %v1924, 1.0
        %v1938 = vadd.f32 %v1926, 1.0
        %v1939 = vadd.f32 %v1928, 1.0
        %v1940 = vadd.f32 %v1930, 1.0
        %v1941 = vadd.f32 %v1932, 1.0
        %v1942 = vadd.f32 %v1934, 1.0
        %v1943 = vrcp.pop %v1935
        %v1944 = vmul.f32 %v1935, %v1943
        %v1945 = vsub.f32 1.0, %v1944
        %v1946 = vmul.f32 %v1943, %v1945
        %v1947 = vadd.f32 %v1943, %v1946
        %vm1948 = vweird.f32 %v1935
        %vm1949 = vweird.f32 %v1943
        %vm1950 = vmor %vm1948, %vm1949
        %v1951 = vsel %vm1950, %v1943, %v1947
        %v1952 = vand.u32 2147483647, %v1935
        %vm1953 = vcmp.eq.f32.partialorder %v1952, 8.507059e+37
        %v1954 = vand.u32 %v1935, 2147483648
        %v1955 = vor.u32 1.1754944e-38, %v1954
        %v1956 = vsel %vm1953, %v1955, %v1951
        %v1957 = vmul.f32 1.0, %v1956
        %v1958 = vrcp.pop %v1936
        %v1959 = vmul.f32 %v1936, %v1958
        %v1960 = vsub.f32 1.0, %v1959
        %v1961 = vmul.f32 %v1958, %v1960
        %v1962 = vadd.f32 %v1958, %v1961
        %vm1963 = vweird.f32 %v1936
        %vm1964 = vweird.f32 %v1958
        %vm1965 = vmor %vm1963, %vm1964
        %v1966 = vsel %vm1965, %v1958, %v1962
        %v1967 = vand.u32 2147483647, %v1936
        %vm1968 = vcmp.eq.f32.partialorder %v1967, 8.507059e+37
        %v1969 = vand.u32 %v1936, 2147483648
        %v1970 = vor.u32 1.1754944e-38, %v1969
        %v1971 = vsel %vm1968, %v1970, %v1966
        %v1972 = vmul.f32 1.0, %v1971
        %v1973 = vrcp.pop %v1937
        %v1974 = vmul.f32 %v1937, %v1973
        %v1975 = vsub.f32 1.0, %v1974
        %v1976 = vmul.f32 %v1973, %v1975
        %v1977 = vadd.f32 %v1973, %v1976
        %vm1978 = vweird.f32 %v1937
        %vm1979 = vweird.f32 %v1973
        %vm1980 = vmor %vm1978, %vm1979
        %v1981 = vsel %vm1980, %v1973, %v1977
        %v1982 = vand.u32 2147483647, %v1937
        %vm1983 = vcmp.eq.f32.partialorder %v1982, 8.507059e+37
        %v1984 = vand.u32 %v1937, 2147483648
        %v1985 = vor.u32 1.1754944e-38, %v1984
        %v1986 = vsel %vm1983, %v1985, %v1981
        %v1987 = vmul.f32 1.0, %v1986
        %v1988 = vrcp.pop %v1938
        %v1989 = vmul.f32 %v1938, %v1988
        %v1990 = vsub.f32 1.0, %v1989
        %v1991 = vmul.f32 %v1988, %v1990
        %v1992 = vadd.f32 %v1988, %v1991
        %vm1993 = vweird.f32 %v1938
        %vm1994 = vweird.f32 %v1988
        %vm1995 = vmor %vm1993, %vm1994
        %v1996 = vsel %vm1995, %v1988, %v1992
        %v1997 = vand.u32 2147483647, %v1938
        %vm1998 = vcmp.eq.f32.partialorder %v1997, 8.507059e+37
        %v1999 = vand.u32 %v1938, 2147483648
        %v2000 = vor.u32 1.1754944e-38, %v1999
        %v2001 = vsel %vm1998, %v2000, %v1996
        %v2002 = vmul.f32 1.0, %v2001
        %v2003 = vrcp.pop %v1939
        %v2004 = vmul.f32 %v1939, %v2003
        %v2005 = vsub.f32 1.0, %v2004
        %v2006 = vmul.f32 %v2003, %v2005
        %v2007 = vadd.f32 %v2003, %v2006
        %vm2008 = vweird.f32 %v1939
        %vm2009 = vweird.f32 %v2003
        %vm2010 = vmor %vm2008, %vm2009
        %v2011 = vsel %vm2010, %v2003, %v2007
        %v2012 = vand.u32 2147483647, %v1939
        %vm2013 = vcmp.eq.f32.partialorder %v2012, 8.507059e+37
        %v2014 = vand.u32 %v1939, 2147483648
        %v2015 = vor.u32 1.1754944e-38, %v2014
        %v2016 = vsel %vm2013, %v2015, %v2011
        %v2017 = vmul.f32 1.0, %v2016
        %v2018 = vrcp.pop %v1940
        %v2019 = vmul.f32 %v1940, %v2018
        %v2020 = vsub.f32 1.0, %v2019
        %v2021 = vmul.f32 %v2018, %v2020
        %v2022 = vadd.f32 %v2018, %v2021
        %vm2023 = vweird.f32 %v1940
        %vm2024 = vweird.f32 %v2018
        %vm2025 = vmor %vm2023, %vm2024
        %v2026 = vsel %vm2025, %v2018, %v2022
        %v2027 = vand.u32 2147483647, %v1940
        %vm2028 = vcmp.eq.f32.partialorder %v2027, 8.507059e+37
        %v2029 = vand.u32 %v1940, 2147483648
        %v2030 = vor.u32 1.1754944e-38, %v2029
        %v2031 = vsel %vm2028, %v2030, %v2026
        %v2032 = vmul.f32 1.0, %v2031
        %v2033 = vrcp.pop %v1941
        %v2034 = vmul.f32 %v1941, %v2033
        %v2035 = vsub.f32 1.0, %v2034
        %v2036 = vmul.f32 %v2033, %v2035
        %v2037 = vadd.f32 %v2033, %v2036
        %vm2038 = vweird.f32 %v1941
        %vm2039 = vweird.f32 %v2033
        %vm2040 = vmor %vm2038, %vm2039
        %v2041 = vsel %vm2040, %v2033, %v2037
        %v2042 = vand.u32 2147483647, %v1941
        %vm2043 = vcmp.eq.f32.partialorder %v2042, 8.507059e+37
        %v2044 = vand.u32 %v1941, 2147483648
        %v2045 = vor.u32 1.1754944e-38, %v2044
        %v2046 = vsel %vm2043, %v2045, %v2041
        %v2047 = vmul.f32 1.0, %v2046
        %v2048 = vrcp.pop %v1942
        %v2049 = vmul.f32 %v1942, %v2048
        %v2050 = vsub.f32 1.0, %v2049
        %v2051 = vmul.f32 %v2048, %v2050
        %v2052 = vadd.f32 %v2048, %v2051
        %vm2053 = vweird.f32 %v1942
        %vm2054 = vweird.f32 %v2048
        %vm2055 = vmor %vm2053, %vm2054
        %v2056 = vsel %vm2055, %v2048, %v2052
        %v2057 = vand.u32 2147483647, %v1942
        %vm2058 = vcmp.eq.f32.partialorder %v2057, 8.507059e+37
        %v2059 = vand.u32 %v1942, 2147483648
        %v2060 = vor.u32 1.1754944e-38, %v2059
        %v2061 = vsel %vm2058, %v2060, %v2056
        %v2062 = vmul.f32 1.0, %v2061
        %v2063 = vmul.f32 %v1857, %v1957
        %v2064 = vmul.f32 %v1871, %v1972
        %v2065 = vmul.f32 %v1885, %v1987
        %v2066 = vmul.f32 %v1899, %v2002
        %v2067 = vmul.f32 %v1859, %v2017
        %v2068 = vmul.f32 %v1873, %v2032
        %v2069 = vmul.f32 %v1887, %v2047
        %v2070 = vmul.f32 %v1901, %v2062
        %v2071 = vpack.c.bf16 %v2067, %v2063
        %v2072 = vpack.c.bf16 %v2068, %v2064
        %v2073 = vpack.c.bf16 %v2069, %v2065
        %v2074 = vpack.c.bf16 %v2070, %v2066
        %v2075 = vld [vmem:[%s633] sm:$0xf]
        %v2076 = vld [vmem:[%s633 + $0x4] sm:$0xf]
        %v2077 = vld [vmem:[%s633 + $0x8] sm:$0xf]
        %v2078 = vld [vmem:[%s633 + $0xc] sm:$0xf]
        %v2079 = vld [vmem:[%s633 + $0x10] sm:$0xf]
        %v2080 = vld [vmem:[%s633 + $0x14] sm:$0xf]
        %v2081 = vld [vmem:[%s633 + $0x18] sm:$0xf]
        %v2082 = vld [vmem:[%s633 + $0x1c] sm:$0xf]
        %v2083 = vld [vmem:[%s633 + $0x20] sm:$0xf]
        %v2084 = vld [vmem:[%s633 + $0x24] sm:$0xf]
        %v2085 = vld [vmem:[%s633 + $0x28] sm:$0xf]
        %v2086 = vld [vmem:[%s633 + $0x2c] sm:$0xf]
        %v2087 = vld [vmem:[%s633 + $0x30] sm:$0xf]
        %v2088 = vld [vmem:[%s633 + $0x34] sm:$0xf]
        %v2089 = vld [vmem:[%s633 + $0x38] sm:$0xf]
        %v2090 = vld [vmem:[%s633 + $0x3c] sm:$0xf]
        %v2091 = vld [vmem:[%s633 + $0x40] sm:$0xf]
        %v2092 = vld [vmem:[%s633 + $0x44] sm:$0xf]
        %v2093 = vld [vmem:[%s633 + $0x48] sm:$0xf]
        %v2094 = vld [vmem:[%s633 + $0x4c] sm:$0xf]
        %v2095 = vld [vmem:[%s633 + $0x50] sm:$0xf]
        %v2096 = vld [vmem:[%s633 + $0x54] sm:$0xf]
        %v2097 = vld [vmem:[%s633 + $0x58] sm:$0xf]
        %v2098 = vld [vmem:[%s633 + $0x5c] sm:$0xf]
        %v2099 = vld [vmem:[%s633 + $0x60] sm:$0xf]
        %v2100 = vld [vmem:[%s633 + $0x64] sm:$0xf]
        %v2101 = vld [vmem:[%s633 + $0x68] sm:$0xf]
        %v2102 = vld [vmem:[%s633 + $0x6c] sm:$0xf]
        %v2103 = vld [vmem:[%s633 + $0x70] sm:$0xf]
        %v2104 = vld [vmem:[%s633 + $0x74] sm:$0xf]
        %v2105 = vld [vmem:[%s633 + $0x78] sm:$0xf]
        %v2106 = vld [vmem:[%s633 + $0x7c] sm:$0xf]
        %v2107 = vld [vmem:[%s633 + $0x80] sm:$0xf]
        %v2108 = vld [vmem:[%s633 + $0x84] sm:$0xf]
        %v2109 = vld [vmem:[%s633 + $0x88] sm:$0xf]
        %v2110 = vld [vmem:[%s633 + $0x8c] sm:$0xf]
        %v2111 = vld [vmem:[%s633 + $0x90] sm:$0xf]
        %v2112 = vld [vmem:[%s633 + $0x94] sm:$0xf]
        %v2113 = vld [vmem:[%s633 + $0x98] sm:$0xf]
        %v2114 = vld [vmem:[%s633 + $0x9c] sm:$0xf]
        %v2115 = vld [vmem:[%s633 + $0xa0] sm:$0xf]
        %v2116 = vld [vmem:[%s633 + $0xa4] sm:$0xf]
        %v2117 = vld [vmem:[%s633 + $0xa8] sm:$0xf]
        %v2118 = vld [vmem:[%s633 + $0xac] sm:$0xf]
        %v2119 = vld [vmem:[%s633 + $0xb0] sm:$0xf]
        %v2120 = vld [vmem:[%s633 + $0xb4] sm:$0xf]
        %v2121 = vld [vmem:[%s633 + $0xb8] sm:$0xf]
        %v2122 = vld [vmem:[%s633 + $0xbc] sm:$0xf]
        %v2123 = vld [vmem:[%s633 + $0xc0] sm:$0xf]
        %v2124 = vld [vmem:[%s633 + $0xc4] sm:$0xf]
        %v2125 = vld [vmem:[%s633 + $0xc8] sm:$0xf]
        %v2126 = vld [vmem:[%s633 + $0xcc] sm:$0xf]
        %v2127 = vld [vmem:[%s633 + $0xd0] sm:$0xf]
        %v2128 = vld [vmem:[%s633 + $0xd4] sm:$0xf]
        %v2129 = vld [vmem:[%s633 + $0xd8] sm:$0xf]
        %v2130 = vld [vmem:[%s633 + $0xdc] sm:$0xf]
        %v2131 = vld [vmem:[%s633 + $0xe0] sm:$0xf]
        %v2132 = vld [vmem:[%s633 + $0xe4] sm:$0xf]
        %v2133 = vld [vmem:[%s633 + $0xe8] sm:$0xf]
        %v2134 = vld [vmem:[%s633 + $0xec] sm:$0xf]
        %v2135 = vld [vmem:[%s633 + $0xf0] sm:$0xf]
        %v2136 = vld [vmem:[%s633 + $0xf4] sm:$0xf]
        %v2137 = vld [vmem:[%s633 + $0xf8] sm:$0xf]
        %v2138 = vld [vmem:[%s633 + $0xfc] sm:$0xf]
        %v2139 = vld [vmem:[%s762] sm:$0x1]
        %v2141 = vperm.slane %v2139, 0
        %v2207 = vunpack.c.l.b16 %v2075
        %v2208 = vunpack.c.l.b16 %v2076
        %v2209 = vunpack.c.l.b16 %v2077
        %v2210 = vunpack.c.l.b16 %v2078
        %v2211 = vunpack.c.l.b16 %v2079
        %v2212 = vunpack.c.l.b16 %v2080
        %v2213 = vunpack.c.l.b16 %v2081
        %v2214 = vunpack.c.l.b16 %v2082
        %v2215 = vunpack.c.l.b16 %v2083
        %v2216 = vunpack.c.l.b16 %v2084
        %v2217 = vunpack.c.l.b16 %v2085
        %v2218 = vunpack.c.l.b16 %v2086
        %v2219 = vunpack.c.l.b16 %v2087
        %v2220 = vunpack.c.l.b16 %v2088
        %v2221 = vunpack.c.l.b16 %v2089
        %v2222 = vunpack.c.l.b16 %v2090
        %v2223 = vunpack.c.l.b16 %v2091
        %v2224 = vunpack.c.l.b16 %v2092
        %v2225 = vunpack.c.l.b16 %v2093
        %v2226 = vunpack.c.l.b16 %v2094
        %v2227 = vunpack.c.l.b16 %v2095
        %v2228 = vunpack.c.l.b16 %v2096
        %v2229 = vunpack.c.l.b16 %v2097
        %v2230 = vunpack.c.l.b16 %v2098
        %v2231 = vunpack.c.l.b16 %v2099
        %v2232 = vunpack.c.l.b16 %v2100
        %v2233 = vunpack.c.l.b16 %v2101
        %v2234 = vunpack.c.l.b16 %v2102
        %v2235 = vunpack.c.l.b16 %v2103
        %v2236 = vunpack.c.l.b16 %v2104
        %v2237 = vunpack.c.l.b16 %v2105
        %v2238 = vunpack.c.l.b16 %v2106
        %v2239 = vunpack.c.l.b16 %v2107
        %v2240 = vunpack.c.l.b16 %v2108
        %v2241 = vunpack.c.l.b16 %v2109
        %v2242 = vunpack.c.l.b16 %v2110
        %v2243 = vunpack.c.l.b16 %v2111
        %v2244 = vunpack.c.l.b16 %v2112
        %v2245 = vunpack.c.l.b16 %v2113
        %v2246 = vunpack.c.l.b16 %v2114
        %v2247 = vunpack.c.l.b16 %v2115
        %v2248 = vunpack.c.l.b16 %v2116
        %v2249 = vunpack.c.l.b16 %v2117
        %v2250 = vunpack.c.l.b16 %v2118
        %v2251 = vunpack.c.l.b16 %v2119
        %v2252 = vunpack.c.l.b16 %v2120
        %v2253 = vunpack.c.l.b16 %v2121
        %v2254 = vunpack.c.l.b16 %v2122
        %v2255 = vunpack.c.l.b16 %v2123
        %v2256 = vunpack.c.l.b16 %v2124
        %v2257 = vunpack.c.l.b16 %v2125
        %v2258 = vunpack.c.l.b16 %v2126
        %v2259 = vunpack.c.l.b16 %v2127
        %v2260 = vunpack.c.l.b16 %v2128
        %v2261 = vunpack.c.l.b16 %v2129
        %v2262 = vunpack.c.l.b16 %v2130
        %v2263 = vunpack.c.l.b16 %v2131
        %v2264 = vunpack.c.l.b16 %v2132
        %v2265 = vunpack.c.l.b16 %v2133
        %v2266 = vunpack.c.l.b16 %v2134
        %v2267 = vunpack.c.l.b16 %v2135
        %v2268 = vunpack.c.l.b16 %v2136
        %v2269 = vunpack.c.l.b16 %v2137
        %v2270 = vunpack.c.l.b16 %v2138
        %v2271 = vpack.c.b16 %v2208, %v2207
        %v2272 = vpack.c.b16 %v2210, %v2209
        %v2273 = vpack.c.b16 %v2212, %v2211
        %v2274 = vpack.c.b16 %v2214, %v2213
        %v2275 = vpack.c.b16 %v2216, %v2215
        %v2276 = vpack.c.b16 %v2218, %v2217
        %v2277 = vpack.c.b16 %v2220, %v2219
        %v2278 = vpack.c.b16 %v2222, %v2221
        %v2279 = vpack.c.b16 %v2224, %v2223
        %v2280 = vpack.c.b16 %v2226, %v2225
        %v2281 = vpack.c.b16 %v2228, %v2227
        %v2282 = vpack.c.b16 %v2230, %v2229
        %v2283 = vpack.c.b16 %v2232, %v2231
        %v2284 = vpack.c.b16 %v2234, %v2233
        %v2285 = vpack.c.b16 %v2236, %v2235
        %v2286 = vpack.c.b16 %v2238, %v2237
        %v2287 = vpack.c.b16 %v2240, %v2239
        %v2288 = vpack.c.b16 %v2242, %v2241
        %v2289 = vpack.c.b16 %v2244, %v2243
        %v2290 = vpack.c.b16 %v2246, %v2245
        %v2291 = vpack.c.b16 %v2248, %v2247
        %v2292 = vpack.c.b16 %v2250, %v2249
        %v2293 = vpack.c.b16 %v2252, %v2251
        %v2294 = vpack.c.b16 %v2254, %v2253
        %v2295 = vpack.c.b16 %v2256, %v2255
        %v2296 = vpack.c.b16 %v2258, %v2257
        %v2297 = vpack.c.b16 %v2260, %v2259
        %v2298 = vpack.c.b16 %v2262, %v2261
        %v2299 = vpack.c.b16 %v2264, %v2263
        %v2300 = vpack.c.b16 %v2266, %v2265
        %v2301 = vpack.c.b16 %v2268, %v2267
        %v2302 = vpack.c.b16 %v2270, %v2269
        %2335 = vmatpush.bf16.msra.mxu0 %v2278
        %2336 = vmatpush.bf16.msra.mxu0 %v2277
        %2337 = vmatpush.bf16.msra.mxu0 %v2276
        %2338 = vmatpush.bf16.msra.mxu0 %v2275
        %2339 = vmatpush.bf16.msra.mxu0 %v2274
        %2340 = vmatpush.bf16.msra.mxu0 %v2273
        %2341 = vmatpush.bf16.msra.mxu0 %v2272
        %2342 = vmatpush.bf16.msra.mxu0 %v2271
        %2343 = vmatmul.bf16.gmra.mxu0 %v2071
        %v2344 = vpop.f32.mrf.mxu0
        %v2345 = vadd.f32 %v2141, %v2344
        %v2346 = vpop.f32.mrf.mxu0
        %v2347 = vadd.f32 %v2141, %v2346
        %2348 = vdwg.mxu0
        %2349 = vmatpush.bf16.msra.mxu0 %v2286
        %2350 = vmatpush.bf16.msra.mxu0 %v2285
        %2351 = vmatpush.bf16.msra.mxu0 %v2284
        %2352 = vmatpush.bf16.msra.mxu0 %v2283
        %2353 = vmatpush.bf16.msra.mxu0 %v2282
        %2354 = vmatpush.bf16.msra.mxu0 %v2281
        %2355 = vmatpush.bf16.msra.mxu0 %v2280
        %2356 = vmatpush.bf16.msra.mxu0 %v2279
        %2357 = vmatmul.bf16.gmra.mxu0 %v2072
        %v2358 = vpop.f32.mrf.mxu0
        %v2359 = vadd.f32 %v2345, %v2358
        %v2360 = vpop.f32.mrf.mxu0
        %v2361 = vadd.f32 %v2347, %v2360
        %2362 = vdwg.mxu0
        %2363 = vmatpush.bf16.msra.mxu0 %v2294
        %2364 = vmatpush.bf16.msra.mxu0 %v2293
        %2365 = vmatpush.bf16.msra.mxu0 %v2292
        %2366 = vmatpush.bf16.msra.mxu0 %v2291
        %2367 = vmatpush.bf16.msra.mxu0 %v2290
        %2368 = vmatpush.bf16.msra.mxu0 %v2289
        %2369 = vmatpush.bf16.msra.mxu0 %v2288
        %2370 = vmatpush.bf16.msra.mxu0 %v2287
        %2371 = vmatmul.bf16.gmra.mxu0 %v2073
        %v2372 = vpop.f32.mrf.mxu0
        %v2373 = vadd.f32 %v2359, %v2372
        %v2374 = vpop.f32.mrf.mxu0
        %v2375 = vadd.f32 %v2361, %v2374
        %2376 = vdwg.mxu0
        %2377 = vmatpush.bf16.msra.mxu0 %v2302
        %2378 = vmatpush.bf16.msra.mxu0 %v2301
        %2379 = vmatpush.bf16.msra.mxu0 %v2300
        %2380 = vmatpush.bf16.msra.mxu0 %v2299
        %2381 = vmatpush.bf16.msra.mxu0 %v2298
        %2382 = vmatpush.bf16.msra.mxu0 %v2297
        %2383 = vmatpush.bf16.msra.mxu0 %v2296
        %2384 = vmatpush.bf16.msra.mxu0 %v2295
        %2385 = vmatmul.bf16.gmra.mxu0 %v2074
        %v2386 = vpop.f32.mrf.mxu0
        %v2387 = vadd.f32 %v2373, %v2386
        %v2388 = vpop.f32.mrf.mxu0
        %v2389 = vadd.f32 %v2375, %v2388
        %2390 = vdwg.mxu0
        %v2391 = vadd.f32 %v1590, %v2387
        %v2392 = vadd.f32 %v1591, %v2389
        %p2393 = scmp.ne.s32.totalorder %s37, 2
        // Predicated region
        $region97: #{clip_forward.1} parent=79 // pred_check
          %p2394 = pneg %p2393
        $region98: #{clip_forward.1} parent=79 // pred_check_branch
          %2396 = sbr.rel (%p2394) target = $region100
        $region99: #{clip_forward.1} parent=79 // pred_region
          %2397 = vst [vmem:[%s767] sm:$0xff] %v2391
          %2398 = vst [vmem:[%s767 + $0x8] sm:$0xff] %v2392
        $region100: #{clip_forward.1} parent=79 // pred_fallthru
          _
        %p2399 = scmp.eq.s32.totalorder %s37, 2
        // Predicated region
        $region101: #{clip_forward.1} parent=79 // pred_check
          %p2400 = pneg %p2399
        $region102: #{clip_forward.1} parent=79 // pred_check_branch
          %2402 = sbr.rel (%p2400) target = $region104
        $region103: #{clip_forward.1} parent=79 // pred_region
          %v2403 = vld [vmem:[%s13] sm:$0x1]
          %v2404 = vld [vmem:[%s14] sm:$0x1]
          %2405 = vadd.xlane.f32.xlu0 %v2391
          %v2406 = vpop.xlane.xlu0 %2405
          %2407 = vadd.xlane.f32.xlu0 %v2392
          %v2408 = vpop.xlane.xlu0 %2407
          %v2409 = vmul.f32 %v2406, %v791
          %v2410 = vmul.f32 %v2408, %v791
          %v2411 = vsub.f32 %v2391, %v2409
          %v2412 = vsub.f32 %v2392, %v2410
          %v2413 = vmul.f32 %v2411, %v2411
          %v2414 = vmul.f32 %v2412, %v2412
          %2415 = vadd.xlane.f32.xlu0 %v2413
          %v2416 = vpop.xlane.xlu0 %2415
          %2417 = vadd.xlane.f32.xlu0 %v2414
          %v2418 = vpop.xlane.xlu0 %2417
          %v2419 = vmul.f32 %v2416, %v791
          %v2420 = vmul.f32 %v2418, %v791
          %v2421 = vadd.f32 %v2419, 1e-05
          %v2422 = vadd.f32 %v2420, 1e-05
          %v2423 = vrsqrt.pop %v2421
          %v2424 = vmul.f32 %v2423, %v2421
          %v2425 = vmul.f32 %v2424, %v2423
          %v2426 = vmul.f32 0.5, %v2425
          %v2427 = vsub.f32 1.5, %v2426
          %v2428 = vmul.f32 %v2423, %v2427
          %vm2429 = vweird.f32 %v2421
          %vm2430 = vweird.f32 %v2423
          %vm2431 = vmor %vm2429, %vm2430
          %v2432 = vsel %vm2431, %v2423, %v2428
          %v2433 = vrsqrt.pop %v2422
          %v2434 = vmul.f32 %v2433, %v2422
          %v2435 = vmul.f32 %v2434, %v2433
          %v2436 = vmul.f32 0.5, %v2435
          %v2437 = vsub.f32 1.5, %v2436
          %v2438 = vmul.f32 %v2433, %v2437
          %vm2439 = vweird.f32 %v2422
          %vm2440 = vweird.f32 %v2433
          %vm2441 = vmor %vm2439, %vm2440
          %v2442 = vsel %vm2441, %v2433, %v2438
          %v2443 = vmul.f32 %v2411, %v2432
          %v2444 = vmul.f32 %v2412, %v2442
          %v2446 = vperm.slane %v2403, 0
          %v2448 = vmul.f32 %v2443, %v2446
          %v2449 = vmul.f32 %v2444, %v2446
          %v2451 = vperm.slane %v2404, 0
          %v2453 = vadd.f32 %v2448, %v2451
          %v2454 = vadd.f32 %v2449, %v2451
          %2455 = vst [vmem:[%s767] sm:$0xff] %v2453
          %2456 = vst [vmem:[%s767 + $0x8] sm:$0xff] %v2454
        $region104: #{clip_forward.1} parent=79 // pred_fallthru
          _
        %p2457 = scmp.lt.s32.totalorder %s36, 1
        %s2458 = scalar_select %p2457, %s36, 1
        %s2459 = smul.addr %s2458, 2
        %s2460 = smul.addr %s2459, 8
        %s2461 = scalar_lea.vmem %s15, %s2460
        // Predicated region
        $region105: #{clip_forward.1} parent=79 // pred_check
          %p2462 = pneg %p442
        $region106: #{clip_forward.1} parent=79 // pred_check_branch
          %2464 = sbr.rel (%p2462) target = $region108
        $region107: #{clip_forward.1} parent=79 // pred_region
          _
        $region108: #{clip_forward.1} parent=79 // pred_fallthru
          _
      $region80: #{clip_forward.1} parent=5 // pred_fallthru
        _
      %p2465 = scmp.le.s32.totalorder 2, %s27
      // Predicated region
      $region109: #{clip_forward.1} parent=5 // pred_check
        %p2466 = pneg %p2465
      $region110: #{clip_forward.1} parent=5 // pred_check_branch
        %2468 = sbr.rel (%p2466) target = $region112
      $region111: #{clip_forward.1} parent=5 // pred_region
        %s2469 = ssub.s32 %s27, 2
        // Predicated region
        $region113: #{clip_forward.1} parent=111 // pred_check
          %p2470 = pneg %p448
        $region114: #{clip_forward.1} parent=111 // pred_check_branch
          %2472 = sbr.rel (%p2470) target = $region116
        $region115: #{clip_forward.1} parent=111 // pred_region
          %p2473 = scmp.lt.s32.totalorder %s38, 1
          %s2474 = scalar_select %p2473, %s38, 1
          %s2475 = smul.addr %s2474, 2
          %s2476 = smul.addr %s2475, 8
          %s2477 = scalar_lea.vmem %s15, %s2476
        $region116: #{clip_forward.1} parent=111 // pred_fallthru
          _
      $region112: #{clip_forward.1} parent=5 // pred_fallthru
        _
    $region6: #{clip_forward.1} parent=1 // loop_footer
      %s31 = sadd.s32 1, %s27
    $region7: #{clip_forward.1} parent=1 // loop_footer_branch
      %26 = sbr.rel target = $region3
    $region8: #{clip_forward.1} parent=1 // loop_exit
      _
    %2478 = vsyncpa [#allocation3], 1
    %s2479 = scalar_lea.sflag [#allocation3], 1
    %2480 = vsyncpa %s2479, 1
    %2481 = vsyncpa [#allocation5], 1
    %s2482 = scalar_lea.sflag [#allocation5], 1
    %2483 = vsyncpa %s2482, 1

</llo_original>
